<compile_context>
chip_gen: v7x
topology: tpu7x:2x2x1
jax: 0.10.0
libtpu: 0.0.40
codegen_flags: <defaults>
</compile_context>

<pallas_src>
import functools

import jax
import jax.numpy as jnp
from jax.experimental import pallas as pl
from jax.experimental.pallas import tpu as pltpu

_EPS = 1e-5


def _basic_block_kernel(stride, Ho, Wo, Hs, Cin, Cmid, downsample, *refs):
    """Fused conv3x3 -> BN -> conv3x3 -> BN -> (+identity/downsample) -> ReLU."""
    if downsample:
        (x_ref, w1_ref, w2_ref, s1_ref, b1_ref, s2_ref, b2_ref,
         wid_ref, sid_ref, bid_ref, out_ref, col1, col2) = refs
    else:
        (x_ref, w1_ref, w2_ref, s1_ref, b1_ref, s2_ref, b2_ref,
         out_ref, col1, col2) = refs

    s = stride
    HW = Ho * Wo

    # Space-to-depth planes of the zero-padded input; plane p*s+q holds
    # xpad[p::s, q::s, :].  One load per plane (1 plane for stride 1, 4 for 2).
    planes = [x_ref[p * Hs:(p + 1) * Hs, :, :] for p in range(s * s)]

    # ---- conv1: pack the 9 shifted/strided taps along channels, one matmul. ----
    for dh in range(3):
        for dw in range(3):
            t = dh * 3 + dw
            pi = (dh % s) * s + (dw % s)          # parity plane of this tap
            r0, c0 = dh // s, dw // s             # stride-1 offset inside plane
            col1[:, :, t * Cin:(t + 1) * Cin] = planes[pi][r0:r0 + Ho,
                                                           c0:c0 + Wo, :]
    y1 = jnp.dot(col1[...].reshape(HW, 9 * Cin), w1_ref[...],
                 preferred_element_type=jnp.float32)
    y1 = y1 * s1_ref[...] + b1_ref[...]           # folded BN1 (module has no ReLU here)
    y1 = y1.reshape(Ho, Wo, Cmid)

    # ---- conv2: build the 9 zero-padded shifted taps of y1 directly in col2 ----
    # Only the halo strips of each tap are written with zeros; the valid window
    # is written once.  Then one (HW, 9*Cmid) x (9*Cmid, Cmid) matmul.
    for dh in range(3):
        for dw in range(3):
            t = dh * 3 + dw
            a, b = dh - 1, dw - 1
            i0, i1 = max(0, -a), Ho - max(0, a)
            j0, j1 = max(0, -b), Wo - max(0, b)
            l0 = t * Cmid
            if i0 > 0:
                col2[0:i0, :, l0:l0 + Cmid] = jnp.zeros((i0, Wo, Cmid),
                                                        jnp.float32)
            if i1 < Ho:
                col2[i1:Ho, :, l0:l0 + Cmid] = jnp.zeros((Ho - i1, Wo, Cmid),
                                                         jnp.float32)
            if j0 > 0:
                col2[:, 0:j0, l0:l0 + Cmid] = jnp.zeros((Ho, j0, Cmid),
                                                        jnp.float32)
            if j1 < Wo:
                col2[:, j1:Wo, l0:l0 + Cmid] = jnp.zeros((Ho, Wo - j1, Cmid),
                                                         jnp.float32)
            col2[i0:i1, j0:j1, l0:l0 + Cmid] = y1[i0 + a:i1 + a,
                                                  j0 + b:j1 + b, :]
    y2 = jnp.dot(col2[...].reshape(HW, 9 * Cmid), w2_ref[...],
                 preferred_element_type=jnp.float32)
    y2 = y2 * s2_ref[...] + b2_ref[...]           # folded BN2

    # ---- identity path: reuse the center tap (dh=dw=1) of the input planes ----
    pc = (1 % s) * s + (1 % s)
    rc = 1 // s
    ident = planes[pc][rc:rc + Ho, rc:rc + Wo, :].reshape(HW, Cin)
    if downsample:
        ident = jnp.dot(ident, wid_ref[...], preferred_element_type=jnp.float32)
        ident = ident * sid_ref[...] + bid_ref[...]
    else:
        ident = ident.astype(jnp.float32)

    out_ref[...] = jnp.maximum(y2 + ident, 0.0).astype(out_ref.dtype)


def _fold_bn(params, prefix, cmid):
    g = params[prefix + '_gamma']
    b = params[prefix + '_beta']
    m = params[prefix + '_mean']
    v = params[prefix + '_var']
    s = g / jnp.sqrt(v + _EPS)
    return s.reshape(1, cmid), (b - m * s).reshape(1, cmid)


def basic_block_pallas(x_nchw, params, stride):
    """Forward pass of BasicBlock. x_nchw: (N, Cin, H, W) f32 -> (N, Cmid, Ho, Wo)."""
    N, Cin, H, W = x_nchw.shape
    w1 = params['conv1_w']                       # (Cmid, Cin, 3, 3), torch OIHW
    Cmid = w1.shape[0]
    s = stride
    downsample = (s != 1) or (Cin != Cmid)
    Ho = (H - 1) // s + 1
    Wo = (W - 1) // s + 1
    HW = Ho * Wo
    Hs = Ho + (2 // s)                           # rows per parity plane
    Ws = Wo + (2 // s)

    # NHWC, zero-pad by 1 (plus round-up so planes are uniform), then
    # space-to-depth into s*s parity planes stacked along the row axis.
    # Total bytes ~= input (no 9x im2col duplication in HBM).
    x = jnp.transpose(x_nchw, (0, 2, 3, 1))
    xpad = jnp.pad(x, ((0, 0), (1, s * Hs - H - 1), (1, s * Ws - W - 1), (0, 0)))
    planes = (xpad.reshape(N, Hs, s, Ws, s, Cin)
                  .transpose(0, 2, 4, 1, 3, 5)
                  .reshape(N, s * s * Hs, Ws, Cin))

    # Weights reshaped so each conv is a single matmul with K = 9*C
    # (row order = (kh, kw, cin), matching the tap packing in the kernel).
    w1k = jnp.transpose(w1, (2, 3, 1, 0)).reshape(9 * Cin, Cmid)
    w2k = jnp.transpose(params['conv2_w'], (2, 3, 1, 0)).reshape(9 * Cmid, Cmid)
    s1, b1 = _fold_bn(params, 'bn1', Cmid)
    s2, b2 = _fold_bn(params, 'bn2', Cmid)

    inputs = [planes, w1k, w2k, s1, b1, s2, b2]
    in_specs = [
        pl.BlockSpec((None, s * s * Hs, Ws, Cin), lambda n: (n, 0, 0, 0)),
        pl.BlockSpec((9 * Cin, Cmid), lambda n: (0, 0)),
        pl.BlockSpec((9 * Cmid, Cmid), lambda n: (0, 0)),
        pl.BlockSpec((1, Cmid), lambda n: (0, 0)),
        pl.BlockSpec((1, Cmid), lambda n: (0, 0)),
        pl.BlockSpec((1, Cmid), lambda n: (0, 0)),
        pl.BlockSpec((1, Cmid), lambda n: (0, 0)),
    ]
    if downsample:
        widk = jnp.transpose(params['convd_w'], (2, 3, 1, 0)).reshape(Cin, Cmid)
        sid, bid = _fold_bn(params, 'bnd', Cmid)
        inputs += [widk, sid, bid]
        in_specs += [
            pl.BlockSpec((Cin, Cmid), lambda n: (0, 0)),
            pl.BlockSpec((1, Cmid), lambda n: (0, 0)),
            pl.BlockSpec((1, Cmid), lambda n: (0, 0)),
        ]

    kernel = functools.partial(_basic_block_kernel, s, Ho, Wo, Hs, Cin, Cmid,
                               downsample)

    out = pl.pallas_call(
        kernel,
        out_shape=jax.ShapeDtypeStruct((N, HW, Cmid), x.dtype),
        grid_spec=pltpu.PrefetchScalarGridSpec(
            num_scalar_prefetch=0,
            grid=(N,),
            in_specs=in_specs,
            out_specs=pl.BlockSpec((None, HW, Cmid), lambda n: (n, 0, 0)),
            scratch_shapes=[
                pltpu.VMEM((Ho, Wo, 9 * Cin), jnp.float32),   # conv1 col buffer
                pltpu.VMEM((Ho, Wo, 9 * Cmid), jnp.float32),  # conv2 col buffer
            ],
        ),
        compiler_params=pltpu.CompilerParams(
            dimension_semantics=("parallel",)),   # megacore-shardable on v7x
    )(*inputs)

    return jnp.transpose(out.reshape(N, Ho, Wo, Cmid), (0, 3, 1, 2))


def basic_block_ref(x, params, stride):
    """Pure-JAX reference (NCHW, same inference-mode BN semantics)."""
    def conv(z, w, s, p):
        return jax.lax.conv_general_dilated(
            z, w, (s, s), [(p, p), (p, p)],
            dimension_numbers=('NCHW', 'OIHW', 'NCHW'),
            precision=jax.lax.Precision.HIGHEST)

    def bn(z, prefix):
        g = params[prefix + '_gamma'].reshape(1, -1, 1, 1)
        b = params[prefix + '_beta'].reshape(1, -1, 1, 1)
        m = params[prefix + '_mean'].reshape(1, -1, 1, 1)
        v = params[prefix + '_var'].reshape(1, -1, 1, 1)
        return (z - m) / jnp.sqrt(v + _EPS) * g + b

    out = bn(conv(x, params['conv1_w'], stride, 1), 'bn1')
    out = bn(conv(out, params['conv2_w'], 1, 1), 'bn2')
    ident = x
    Cin, Cmid = x.shape[1], params['conv1_w'].shape[0]
    if stride != 1 or Cin != Cmid:
        ident = bn(conv(x, params['convd_w'], stride, 0), 'bnd')
    return jnp.maximum(out + ident, 0.0)


def init_params(key, in_channels, mid, stride):
    ks = jax.random.split(key, 6)
    p = {}
    p['conv1_w'] = (jax.random.normal(ks[0], (mid, in_channels, 3, 3), jnp.float32)
                    * (2.0 / (in_channels * 9)) ** 0.5)
    p['conv2_w'] = (jax.random.normal(ks[1], (mid, mid, 3, 3), jnp.float32)
                    * (2.0 / (mid * 9)) ** 0.5)

    def init_bn(k, prefix):
        k1, k2, k3, k4 = jax.random.split(k, 4)
        p[prefix + '_gamma'] = jax.random.uniform(k1, (mid,), jnp.float32, 0.5, 1.5)
        p[prefix + '_beta'] = jax.random.normal(k2, (mid,), jnp.float32) * 0.1
        p[prefix + '_mean'] = jax.random.normal(k3, (mid,), jnp.float32) * 0.1
        p[prefix + '_var'] = jax.random.uniform(k4, (mid,), jnp.float32, 0.5, 1.5)

    init_bn(ks[2], 'bn1')
    init_bn(ks[3], 'bn2')
    if stride != 1 or in_channels != mid:
        p['convd_w'] = (jax.random.normal(ks[4], (mid, in_channels, 1, 1), jnp.float32)
                        * (2.0 / in_channels) ** 0.5)
        init_bn(ks[5], 'bnd')
    return p


if __name__ == "__main__":
    key = jax.random.PRNGKey(0)

    # Case 1: downsample path (stride=2, channel change), x: (2, 4, 16, 16).
    k_x1, k_p1, k_x2, k_p2 = jax.random.split(key, 4)
    x1 = jax.random.normal(k_x1, (2, 4, 16, 16), jnp.float32)
    p1 = init_params(k_p1, in_channels=4, mid=8, stride=2)
    out1 = jax.block_until_ready(basic_block_pallas(x1, p1, stride=2))
    ref1 = jax.block_until_ready(basic_block_ref(x1, p1, stride=2))
    assert out1.shape == (2, 8, 8, 8), out1.shape
    assert jnp.allclose(out1, ref1, atol=1e-3, rtol=1e-3), float(
        jnp.max(jnp.abs(out1 - ref1)))

    # Case 2: pure identity path (stride=1, same channels), x: (2, 8, 16, 16).
    x2 = jax.random.normal(k_x2, (2, 8, 16, 16), jnp.float32)
    p2 = init_params(k_p2, in_channels=8, mid=8, stride=1)
    out2 = jax.block_until_ready(basic_block_pallas(x2, p2, stride=1))
    ref2 = jax.block_until_ready(basic_block_ref(x2, p2, stride=1))
    assert out2.shape == (2, 8, 16, 16), out2.shape
    assert jnp.allclose(out2, ref2, atol=1e-3, rtol=1e-3), float(
        jnp.max(jnp.abs(out2 - ref2)))

    print("KERNEL_OK")
</pallas_src>

<mosaic_0001>
module attributes {stable_mosaic.version = 11 : i64} {
  func.func @_basic_block_kernel(%arg0: i32, %arg1: memref<1x36x9x4xf32, #tpu.memory_space<vmem>>, %arg2: memref<36x8xf32, #tpu.memory_space<vmem>>, %arg3: memref<72x8xf32, #tpu.memory_space<vmem>>, %arg4: memref<1x8xf32, #tpu.memory_space<vmem>>, %arg5: memref<1x8xf32, #tpu.memory_space<vmem>>, %arg6: memref<1x8xf32, #tpu.memory_space<vmem>>, %arg7: memref<1x8xf32, #tpu.memory_space<vmem>>, %arg8: memref<4x8xf32, #tpu.memory_space<vmem>>, %arg9: memref<1x8xf32, #tpu.memory_space<vmem>>, %arg10: memref<1x8xf32, #tpu.memory_space<vmem>>, %arg11: memref<1x64x8xf32, #tpu.memory_space<vmem>>, %arg12: memref<8x8x36xf32, #tpu.memory_space<vmem>>, %arg13: memref<8x8x72xf32, #tpu.memory_space<vmem>>) attributes {dimension_semantics = [#tpu.dimension_semantics<parallel>], iteration_bounds = array<i64: 2>, scalar_prefetch = 0 : i64, scratch_operands = 2 : i64, tpu.core_type = #tpu.core_type<tc>, window_params = [{transform_indices = @transform_0, window_bounds = array<i64: 1, 36, 9, 4>}, {pipeline_mode = #tpu.pipeline_mode<synchronous>, transform_indices = @transform_1, window_bounds = array<i64: 36, 8>}, {pipeline_mode = #tpu.pipeline_mode<synchronous>, transform_indices = @transform_2, window_bounds = array<i64: 72, 8>}, {pipeline_mode = #tpu.pipeline_mode<synchronous>, transform_indices = @transform_3, window_bounds = array<i64: 1, 8>}, {pipeline_mode = #tpu.pipeline_mode<synchronous>, transform_indices = @transform_4, window_bounds = array<i64: 1, 8>}, {pipeline_mode = #tpu.pipeline_mode<synchronous>, transform_indices = @transform_5, window_bounds = array<i64: 1, 8>}, {pipeline_mode = #tpu.pipeline_mode<synchronous>, transform_indices = @transform_6, window_bounds = array<i64: 1, 8>}, {pipeline_mode = #tpu.pipeline_mode<synchronous>, transform_indices = @transform_7, window_bounds = array<i64: 4, 8>}, {pipeline_mode = #tpu.pipeline_mode<synchronous>, transform_indices = @transform_8, window_bounds = array<i64: 1, 8>}, {pipeline_mode = #tpu.pipeline_mode<synchronous>, transform_indices = @transform_9, window_bounds = array<i64: 1, 8>}, {transform_indices = @transform_10, window_bounds = array<i64: 1, 64, 8>}]} {
    %c0 = arith.constant 0 : index
    %c0_0 = arith.constant 0 : index
    %c0_1 = arith.constant 0 : index
    %c0_2 = arith.constant 0 : index
    %0 = vector.load %arg1[%c0, %c0_0, %c0_1, %c0_2] : memref<1x36x9x4xf32, #tpu.memory_space<vmem>>, vector<1x9x9x4xf32>
    %1 = vector.shape_cast %0 : vector<1x9x9x4xf32> to vector<9x9x4xf32>
    %c0_3 = arith.constant 0 : index
    %c9 = arith.constant 9 : index
    %c0_4 = arith.constant 0 : index
    %c0_5 = arith.constant 0 : index
    %2 = vector.load %arg1[%c0_3, %c9, %c0_4, %c0_5] : memref<1x36x9x4xf32, #tpu.memory_space<vmem>>, vector<1x9x9x4xf32>
    %3 = vector.shape_cast %2 : vector<1x9x9x4xf32> to vector<9x9x4xf32>
    %c0_6 = arith.constant 0 : index
    %c18 = arith.constant 18 : index
    %c0_7 = arith.constant 0 : index
    %c0_8 = arith.constant 0 : index
    %4 = vector.load %arg1[%c0_6, %c18, %c0_7, %c0_8] : memref<1x36x9x4xf32, #tpu.memory_space<vmem>>, vector<1x9x9x4xf32>
    %5 = vector.shape_cast %4 : vector<1x9x9x4xf32> to vector<9x9x4xf32>
    %c0_9 = arith.constant 0 : index
    %c27 = arith.constant 27 : index
    %c0_10 = arith.constant 0 : index
    %c0_11 = arith.constant 0 : index
    %6 = vector.load %arg1[%c0_9, %c27, %c0_10, %c0_11] : memref<1x36x9x4xf32, #tpu.memory_space<vmem>>, vector<1x9x9x4xf32>
    %7 = vector.shape_cast %6 : vector<1x9x9x4xf32> to vector<9x9x4xf32>
    %8 = vector.extract_strided_slice %1 {offsets = [0, 0, 0], sizes = [8, 8, 4], strides = [1, 1, 1]} : vector<9x9x4xf32> to vector<8x8x4xf32>
    %c0_12 = arith.constant 0 : index
    %c0_13 = arith.constant 0 : index
    %c0_14 = arith.constant 0 : index
    %9 = vector.load %arg12[%c0_12, %c0_13, %c0_14] : memref<8x8x36xf32, #tpu.memory_space<vmem>>, vector<8x8x4xf32>
    tpu.vector_store %arg12[%c0_12, %c0_13, %c0_14], %8 {strides = array<i32>} : memref<8x8x36xf32, #tpu.memory_space<vmem>>, vector<8x8x4xf32>,
    %10 = vector.extract_strided_slice %3 {offsets = [0, 0, 0], sizes = [8, 8, 4], strides = [1, 1, 1]} : vector<9x9x4xf32> to vector<8x8x4xf32>
    %c0_15 = arith.constant 0 : index
    %c0_16 = arith.constant 0 : index
    %c4 = arith.constant 4 : index
    %11 = vector.load %arg12[%c0_15, %c0_16, %c4] : memref<8x8x36xf32, #tpu.memory_space<vmem>>, vector<8x8x4xf32>
    tpu.vector_store %arg12[%c0_15, %c0_16, %c4], %10 {strides = array<i32>} : memref<8x8x36xf32, #tpu.memory_space<vmem>>, vector<8x8x4xf32>,
    %12 = vector.extract_strided_slice %1 {offsets = [0, 1, 0], sizes = [8, 8, 4], strides = [1, 1, 1]} : vector<9x9x4xf32> to vector<8x8x4xf32>
    %c0_17 = arith.constant 0 : index
    %c0_18 = arith.constant 0 : index
    %c8 = arith.constant 8 : index
    %13 = vector.load %arg12[%c0_17, %c0_18, %c8] : memref<8x8x36xf32, #tpu.memory_space<vmem>>, vector<8x8x4xf32>
    tpu.vector_store %arg12[%c0_17, %c0_18, %c8], %12 {strides = array<i32>} : memref<8x8x36xf32, #tpu.memory_space<vmem>>, vector<8x8x4xf32>,
    %14 = vector.extract_strided_slice %5 {offsets = [0, 0, 0], sizes = [8, 8, 4], strides = [1, 1, 1]} : vector<9x9x4xf32> to vector<8x8x4xf32>
    %c0_19 = arith.constant 0 : index
    %c0_20 = arith.constant 0 : index
    %c12 = arith.constant 12 : index
    %15 = vector.load %arg12[%c0_19, %c0_20, %c12] : memref<8x8x36xf32, #tpu.memory_space<vmem>>, vector<8x8x4xf32>
    tpu.vector_store %arg12[%c0_19, %c0_20, %c12], %14 {strides = array<i32>} : memref<8x8x36xf32, #tpu.memory_space<vmem>>, vector<8x8x4xf32>,
    %16 = vector.extract_strided_slice %7 {offsets = [0, 0, 0], sizes = [8, 8, 4], strides = [1, 1, 1]} : vector<9x9x4xf32> to vector<8x8x4xf32>
    %c0_21 = arith.constant 0 : index
    %c0_22 = arith.constant 0 : index
    %c16 = arith.constant 16 : index
    %17 = vector.load %arg12[%c0_21, %c0_22, %c16] : memref<8x8x36xf32, #tpu.memory_space<vmem>>, vector<8x8x4xf32>
    tpu.vector_store %arg12[%c0_21, %c0_22, %c16], %16 {strides = array<i32>} : memref<8x8x36xf32, #tpu.memory_space<vmem>>, vector<8x8x4xf32>,
    %18 = vector.extract_strided_slice %5 {offsets = [0, 1, 0], sizes = [8, 8, 4], strides = [1, 1, 1]} : vector<9x9x4xf32> to vector<8x8x4xf32>
    %c0_23 = arith.constant 0 : index
    %c0_24 = arith.constant 0 : index
    %c20 = arith.constant 20 : index
    %19 = vector.load %arg12[%c0_23, %c0_24, %c20] : memref<8x8x36xf32, #tpu.memory_space<vmem>>, vector<8x8x4xf32>
    tpu.vector_store %arg12[%c0_23, %c0_24, %c20], %18 {strides = array<i32>} : memref<8x8x36xf32, #tpu.memory_space<vmem>>, vector<8x8x4xf32>,
    %20 = vector.extract_strided_slice %1 {offsets = [1, 0, 0], sizes = [8, 8, 4], strides = [1, 1, 1]} : vector<9x9x4xf32> to vector<8x8x4xf32>
    %c0_25 = arith.constant 0 : index
    %c0_26 = arith.constant 0 : index
    %c24 = arith.constant 24 : index
    %21 = vector.load %arg12[%c0_25, %c0_26, %c24] : memref<8x8x36xf32, #tpu.memory_space<vmem>>, vector<8x8x4xf32>
    tpu.vector_store %arg12[%c0_25, %c0_26, %c24], %20 {strides = array<i32>} : memref<8x8x36xf32, #tpu.memory_space<vmem>>, vector<8x8x4xf32>,
    %22 = vector.extract_strided_slice %3 {offsets = [1, 0, 0], sizes = [8, 8, 4], strides = [1, 1, 1]} : vector<9x9x4xf32> to vector<8x8x4xf32>
    %c0_27 = arith.constant 0 : index
    %c0_28 = arith.constant 0 : index
    %c28 = arith.constant 28 : index
    %23 = vector.load %arg12[%c0_27, %c0_28, %c28] : memref<8x8x36xf32, #tpu.memory_space<vmem>>, vector<8x8x4xf32>
    tpu.vector_store %arg12[%c0_27, %c0_28, %c28], %22 {strides = array<i32>} : memref<8x8x36xf32, #tpu.memory_space<vmem>>, vector<8x8x4xf32>,
    %24 = vector.extract_strided_slice %1 {offsets = [1, 1, 0], sizes = [8, 8, 4], strides = [1, 1, 1]} : vector<9x9x4xf32> to vector<8x8x4xf32>
    %c0_29 = arith.constant 0 : index
    %c0_30 = arith.constant 0 : index
    %c32 = arith.constant 32 : index
    %25 = vector.load %arg12[%c0_29, %c0_30, %c32] : memref<8x8x36xf32, #tpu.memory_space<vmem>>, vector<8x8x4xf32>
    tpu.vector_store %arg12[%c0_29, %c0_30, %c32], %24 {strides = array<i32>} : memref<8x8x36xf32, #tpu.memory_space<vmem>>, vector<8x8x4xf32>,
    %c0_31 = arith.constant 0 : index
    %c0_32 = arith.constant 0 : index
    %c0_33 = arith.constant 0 : index
    %26 = vector.load %arg12[%c0_31, %c0_32, %c0_33] : memref<8x8x36xf32, #tpu.memory_space<vmem>>, vector<8x8x36xf32>
    %27 = vector.shape_cast %26 : vector<8x8x36xf32> to vector<64x36xf32>
    %c0_34 = arith.constant 0 : index
    %c0_35 = arith.constant 0 : index
    %28 = vector.load %arg2[%c0_34, %c0_35] : memref<36x8xf32, #tpu.memory_space<vmem>>, vector<36x8xf32>
    %cst = arith.constant dense<0.000000e+00> : vector<64x8xf32>
    %29 = tpu.matmul %27, %28, %cst {dimension_numbers = #tpu.dot_dimension_numbers<[1], [0], [0], [1], [0, 0, 1, 1], [], []>} : vector<64x36xf32>, vector<36x8xf32>, vector<64x8xf32> -> vector<64x8xf32>
    %c0_36 = arith.constant 0 : index
    %c0_37 = arith.constant 0 : index
    %30 = vector.load %arg4[%c0_36, %c0_37] : memref<1x8xf32, #tpu.memory_space<vmem>>, vector<1x8xf32>
    %31 = vector.broadcast %30 : vector<1x8xf32> to vector<64x8xf32>
    %32 = arith.mulf %29, %31 : vector<64x8xf32>
    %c0_38 = arith.constant 0 : index
    %c0_39 = arith.constant 0 : index
    %33 = vector.load %arg5[%c0_38, %c0_39] : memref<1x8xf32, #tpu.memory_space<vmem>>, vector<1x8xf32>
    %34 = vector.broadcast %33 : vector<1x8xf32> to vector<64x8xf32>
    %35 = arith.addf %32, %34 : vector<64x8xf32>
    %36 = vector.shape_cast %35 : vector<64x8xf32> to vector<8x8x8xf32>
    %cst_40 = arith.constant 0.000000e+00 : f32
    %37 = vector.broadcast %cst_40 : f32 to vector<1x8x8xf32>
    %c0_41 = arith.constant 0 : index
    %c0_42 = arith.constant 0 : index
    %c0_43 = arith.constant 0 : index
    %38 = vector.load %arg13[%c0_41, %c0_42, %c0_43] : memref<8x8x72xf32, #tpu.memory_space<vmem>>, vector<1x8x8xf32>
    tpu.vector_store %arg13[%c0_41, %c0_42, %c0_43], %37 {strides = array<i32>} : memref<8x8x72xf32, #tpu.memory_space<vmem>>, vector<1x8x8xf32>,
    %cst_44 = arith.constant 0.000000e+00 : f32
    %39 = vector.broadcast %cst_44 : f32 to vector<8x1x8xf32>
    %c0_45 = arith.constant 0 : index
    %c0_46 = arith.constant 0 : index
    %c0_47 = arith.constant 0 : index
    %40 = vector.load %arg13[%c0_45, %c0_46, %c0_47] : memref<8x8x72xf32, #tpu.memory_space<vmem>>, vector<8x1x8xf32>
    tpu.vector_store %arg13[%c0_45, %c0_46, %c0_47], %39 {strides = array<i32>} : memref<8x8x72xf32, #tpu.memory_space<vmem>>, vector<8x1x8xf32>,
    %41 = vector.extract_strided_slice %36 {offsets = [0, 0, 0], sizes = [7, 7, 8], strides = [1, 1, 1]} : vector<8x8x8xf32> to vector<7x7x8xf32>
    %c1 = arith.constant 1 : index
    %c1_48 = arith.constant 1 : index
    %c0_49 = arith.constant 0 : index
    %42 = vector.load %arg13[%c1, %c1_48, %c0_49] : memref<8x8x72xf32, #tpu.memory_space<vmem>>, vector<7x7x8xf32>
    tpu.vector_store %arg13[%c1, %c1_48, %c0_49], %41 {strides = array<i32>} : memref<8x8x72xf32, #tpu.memory_space<vmem>>, vector<7x7x8xf32>,
    %cst_50 = arith.constant 0.000000e+00 : f32
    %43 = vector.broadcast %cst_50 : f32 to vector<1x8x8xf32>
    %c0_51 = arith.constant 0 : index
    %c0_52 = arith.constant 0 : index
    %c8_53 = arith.constant 8 : index
    %44 = vector.load %arg13[%c0_51, %c0_52, %c8_53] : memref<8x8x72xf32, #tpu.memory_space<vmem>>, vector<1x8x8xf32>
    tpu.vector_store %arg13[%c0_51, %c0_52, %c8_53], %43 {strides = array<i32>} : memref<8x8x72xf32, #tpu.memory_space<vmem>>, vector<1x8x8xf32>,
    %45 = vector.extract_strided_slice %36 {offsets = [0, 0, 0], sizes = [7, 8, 8], strides = [1, 1, 1]} : vector<8x8x8xf32> to vector<7x8x8xf32>
    %c1_54 = arith.constant 1 : index
    %c0_55 = arith.constant 0 : index
    %c8_56 = arith.constant 8 : index
    %46 = vector.load %arg13[%c1_54, %c0_55, %c8_56] : memref<8x8x72xf32, #tpu.memory_space<vmem>>, vector<7x8x8xf32>
    tpu.vector_store %arg13[%c1_54, %c0_55, %c8_56], %45 {strides = array<i32>} : memref<8x8x72xf32, #tpu.memory_space<vmem>>, vector<7x8x8xf32>,
    %cst_57 = arith.constant 0.000000e+00 : f32
    %47 = vector.broadcast %cst_57 : f32 to vector<1x8x8xf32>
    %c0_58 = arith.constant 0 : index
    %c0_59 = arith.constant 0 : index
    %c16_60 = arith.constant 16 : index
    %48 = vector.load %arg13[%c0_58, %c0_59, %c16_60] : memref<8x8x72xf32, #tpu.memory_space<vmem>>, vector<1x8x8xf32>
    tpu.vector_store %arg13[%c0_58, %c0_59, %c16_60], %47 {strides = array<i32>} : memref<8x8x72xf32, #tpu.memory_space<vmem>>, vector<1x8x8xf32>,
    %cst_61 = arith.constant 0.000000e+00 : f32
    %49 = vector.broadcast %cst_61 : f32 to vector<8x1x8xf32>
    %c0_62 = arith.constant 0 : index
    %c7 = arith.constant 7 : index
    %c16_63 = arith.constant 16 : index
    %50 = vector.load %arg13[%c0_62, %c7, %c16_63] : memref<8x8x72xf32, #tpu.memory_space<vmem>>, vector<8x1x8xf32>
    tpu.vector_store %arg13[%c0_62, %c7, %c16_63], %49 {strides = array<i32>} : memref<8x8x72xf32, #tpu.memory_space<vmem>>, vector<8x1x8xf32>,
    %51 = vector.extract_strided_slice %36 {offsets = [0, 1, 0], sizes = [7, 7, 8], strides = [1, 1, 1]} : vector<8x8x8xf32> to vector<7x7x8xf32>
    %c1_64 = arith.constant 1 : index
    %c0_65 = arith.constant 0 : index
    %c16_66 = arith.constant 16 : index
    %52 = vector.load %arg13[%c1_64, %c0_65, %c16_66] : memref<8x8x72xf32, #tpu.memory_space<vmem>>, vector<7x7x8xf32>
    tpu.vector_store %arg13[%c1_64, %c0_65, %c16_66], %51 {strides = array<i32>} : memref<8x8x72xf32, #tpu.memory_space<vmem>>, vector<7x7x8xf32>,
    %cst_67 = arith.constant 0.000000e+00 : f32
    %53 = vector.broadcast %cst_67 : f32 to vector<8x1x8xf32>
    %c0_68 = arith.constant 0 : index
    %c0_69 = arith.constant 0 : index
    %c24_70 = arith.constant 24 : index
    %54 = vector.load %arg13[%c0_68, %c0_69, %c24_70] : memref<8x8x72xf32, #tpu.memory_space<vmem>>, vector<8x1x8xf32>
    tpu.vector_store %arg13[%c0_68, %c0_69, %c24_70], %53 {strides = array<i32>} : memref<8x8x72xf32, #tpu.memory_space<vmem>>, vector<8x1x8xf32>,
    %55 = vector.extract_strided_slice %36 {offsets = [0, 0, 0], sizes = [8, 7, 8], strides = [1, 1, 1]} : vector<8x8x8xf32> to vector<8x7x8xf32>
    %c0_71 = arith.constant 0 : index
    %c1_72 = arith.constant 1 : index
    %c24_73 = arith.constant 24 : index
    %56 = vector.load %arg13[%c0_71, %c1_72, %c24_73] : memref<8x8x72xf32, #tpu.memory_space<vmem>>, vector<8x7x8xf32>
    tpu.vector_store %arg13[%c0_71, %c1_72, %c24_73], %55 {strides = array<i32>} : memref<8x8x72xf32, #tpu.memory_space<vmem>>, vector<8x7x8xf32>,
    %c0_74 = arith.constant 0 : index
    %c0_75 = arith.constant 0 : index
    %c32_76 = arith.constant 32 : index
    %57 = vector.load %arg13[%c0_74, %c0_75, %c32_76] : memref<8x8x72xf32, #tpu.memory_space<vmem>>, vector<8x8x8xf32>
    tpu.vector_store %arg13[%c0_74, %c0_75, %c32_76], %36 {strides = array<i32>} : memref<8x8x72xf32, #tpu.memory_space<vmem>>, vector<8x8x8xf32>,
    %cst_77 = arith.constant 0.000000e+00 : f32
    %58 = vector.broadcast %cst_77 : f32 to vector<8x1x8xf32>
    %c0_78 = arith.constant 0 : index
    %c7_79 = arith.constant 7 : index
    %c40 = arith.constant 40 : index
    %59 = vector.load %arg13[%c0_78, %c7_79, %c40] : memref<8x8x72xf32, #tpu.memory_space<vmem>>, vector<8x1x8xf32>
    tpu.vector_store %arg13[%c0_78, %c7_79, %c40], %58 {strides = array<i32>} : memref<8x8x72xf32, #tpu.memory_space<vmem>>, vector<8x1x8xf32>,
    %60 = vector.extract_strided_slice %36 {offsets = [0, 1, 0], sizes = [8, 7, 8], strides = [1, 1, 1]} : vector<8x8x8xf32> to vector<8x7x8xf32>
    %c0_80 = arith.constant 0 : index
    %c0_81 = arith.constant 0 : index
    %c40_82 = arith.constant 40 : index
    %61 = vector.load %arg13[%c0_80, %c0_81, %c40_82] : memref<8x8x72xf32, #tpu.memory_space<vmem>>, vector<8x7x8xf32>
    tpu.vector_store %arg13[%c0_80, %c0_81, %c40_82], %60 {strides = array<i32>} : memref<8x8x72xf32, #tpu.memory_space<vmem>>, vector<8x7x8xf32>,
    %cst_83 = arith.constant 0.000000e+00 : f32
    %62 = vector.broadcast %cst_83 : f32 to vector<1x8x8xf32>
    %c7_84 = arith.constant 7 : index
    %c0_85 = arith.constant 0 : index
    %c48 = arith.constant 48 : index
    %63 = vector.load %arg13[%c7_84, %c0_85, %c48] : memref<8x8x72xf32, #tpu.memory_space<vmem>>, vector<1x8x8xf32>
    tpu.vector_store %arg13[%c7_84, %c0_85, %c48], %62 {strides = array<i32>} : memref<8x8x72xf32, #tpu.memory_space<vmem>>, vector<1x8x8xf32>,
    %cst_86 = arith.constant 0.000000e+00 : f32
    %64 = vector.broadcast %cst_86 : f32 to vector<8x1x8xf32>
    %c0_87 = arith.constant 0 : index
    %c0_88 = arith.constant 0 : index
    %c48_89 = arith.constant 48 : index
    %65 = vector.load %arg13[%c0_87, %c0_88, %c48_89] : memref<8x8x72xf32, #tpu.memory_space<vmem>>, vector<8x1x8xf32>
    tpu.vector_store %arg13[%c0_87, %c0_88, %c48_89], %64 {strides = array<i32>} : memref<8x8x72xf32, #tpu.memory_space<vmem>>, vector<8x1x8xf32>,
    %66 = vector.extract_strided_slice %36 {offsets = [1, 0, 0], sizes = [7, 7, 8], strides = [1, 1, 1]} : vector<8x8x8xf32> to vector<7x7x8xf32>
    %c0_90 = arith.constant 0 : index
    %c1_91 = arith.constant 1 : index
    %c48_92 = arith.constant 48 : index
    %67 = vector.load %arg13[%c0_90, %c1_91, %c48_92] : memref<8x8x72xf32, #tpu.memory_space<vmem>>, vector<7x7x8xf32>
    tpu.vector_store %arg13[%c0_90, %c1_91, %c48_92], %66 {strides = array<i32>} : memref<8x8x72xf32, #tpu.memory_space<vmem>>, vector<7x7x8xf32>,
    %cst_93 = arith.constant 0.000000e+00 : f32
    %68 = vector.broadcast %cst_93 : f32 to vector<1x8x8xf32>
    %c7_94 = arith.constant 7 : index
    %c0_95 = arith.constant 0 : index
    %c56 = arith.constant 56 : index
    %69 = vector.load %arg13[%c7_94, %c0_95, %c56] : memref<8x8x72xf32, #tpu.memory_space<vmem>>, vector<1x8x8xf32>
    tpu.vector_store %arg13[%c7_94, %c0_95, %c56], %68 {strides = array<i32>} : memref<8x8x72xf32, #tpu.memory_space<vmem>>, vector<1x8x8xf32>,
    %70 = vector.extract_strided_slice %36 {offsets = [1, 0, 0], sizes = [7, 8, 8], strides = [1, 1, 1]} : vector<8x8x8xf32> to vector<7x8x8xf32>
    %c0_96 = arith.constant 0 : index
    %c0_97 = arith.constant 0 : index
    %c56_98 = arith.constant 56 : index
    %71 = vector.load %arg13[%c0_96, %c0_97, %c56_98] : memref<8x8x72xf32, #tpu.memory_space<vmem>>, vector<7x8x8xf32>
    tpu.vector_store %arg13[%c0_96, %c0_97, %c56_98], %70 {strides = array<i32>} : memref<8x8x72xf32, #tpu.memory_space<vmem>>, vector<7x8x8xf32>,
    %cst_99 = arith.constant 0.000000e+00 : f32
    %72 = vector.broadcast %cst_99 : f32 to vector<1x8x8xf32>
    %c7_100 = arith.constant 7 : index
    %c0_101 = arith.constant 0 : index
    %c64 = arith.constant 64 : index
    %73 = vector.load %arg13[%c7_100, %c0_101, %c64] : memref<8x8x72xf32, #tpu.memory_space<vmem>>, vector<1x8x8xf32>
    tpu.vector_store %arg13[%c7_100, %c0_101, %c64], %72 {strides = array<i32>} : memref<8x8x72xf32, #tpu.memory_space<vmem>>, vector<1x8x8xf32>,
    %cst_102 = arith.constant 0.000000e+00 : f32
    %74 = vector.broadcast %cst_102 : f32 to vector<8x1x8xf32>
    %c0_103 = arith.constant 0 : index
    %c7_104 = arith.constant 7 : index
    %c64_105 = arith.constant 64 : index
    %75 = vector.load %arg13[%c0_103, %c7_104, %c64_105] : memref<8x8x72xf32, #tpu.memory_space<vmem>>, vector<8x1x8xf32>
    tpu.vector_store %arg13[%c0_103, %c7_104, %c64_105], %74 {strides = array<i32>} : memref<8x8x72xf32, #tpu.memory_space<vmem>>, vector<8x1x8xf32>,
    %76 = vector.extract_strided_slice %36 {offsets = [1, 1, 0], sizes = [7, 7, 8], strides = [1, 1, 1]} : vector<8x8x8xf32> to vector<7x7x8xf32>
    %c0_106 = arith.constant 0 : index
    %c0_107 = arith.constant 0 : index
    %c64_108 = arith.constant 64 : index
    %77 = vector.load %arg13[%c0_106, %c0_107, %c64_108] : memref<8x8x72xf32, #tpu.memory_space<vmem>>, vector<7x7x8xf32>
    tpu.vector_store %arg13[%c0_106, %c0_107, %c64_108], %76 {strides = array<i32>} : memref<8x8x72xf32, #tpu.memory_space<vmem>>, vector<7x7x8xf32>,
    %c0_109 = arith.constant 0 : index
    %c0_110 = arith.constant 0 : index
    %c0_111 = arith.constant 0 : index
    %78 = vector.load %arg13[%c0_109, %c0_110, %c0_111] : memref<8x8x72xf32, #tpu.memory_space<vmem>>, vector<8x8x72xf32>
    %79 = vector.shape_cast %78 : vector<8x8x72xf32> to vector<64x72xf32>
    %c0_112 = arith.constant 0 : index
    %c0_113 = arith.constant 0 : index
    %80 = vector.load %arg3[%c0_112, %c0_113] : memref<72x8xf32, #tpu.memory_space<vmem>>, vector<72x8xf32>
    %cst_114 = arith.constant dense<0.000000e+00> : vector<64x8xf32>
    %81 = tpu.matmul %79, %80, %cst_114 {dimension_numbers = #tpu.dot_dimension_numbers<[1], [0], [0], [1], [0, 0, 1, 1], [], []>} : vector<64x72xf32>, vector<72x8xf32>, vector<64x8xf32> -> vector<64x8xf32>
    %c0_115 = arith.constant 0 : index
    %c0_116 = arith.constant 0 : index
    %82 = vector.load %arg6[%c0_115, %c0_116] : memref<1x8xf32, #tpu.memory_space<vmem>>, vector<1x8xf32>
    %83 = vector.broadcast %82 : vector<1x8xf32> to vector<64x8xf32>
    %84 = arith.mulf %81, %83 : vector<64x8xf32>
    %c0_117 = arith.constant 0 : index
    %c0_118 = arith.constant 0 : index
    %85 = vector.load %arg7[%c0_117, %c0_118] : memref<1x8xf32, #tpu.memory_space<vmem>>, vector<1x8xf32>
    %86 = vector.broadcast %85 : vector<1x8xf32> to vector<64x8xf32>
    %87 = arith.addf %84, %86 : vector<64x8xf32>
    %88 = vector.extract_strided_slice %7 {offsets = [0, 0, 0], sizes = [8, 8, 4], strides = [1, 1, 1]} : vector<9x9x4xf32> to vector<8x8x4xf32>
    %89 = vector.shape_cast %88 : vector<8x8x4xf32> to vector<64x4xf32>
    %c0_119 = arith.constant 0 : index
    %c0_120 = arith.constant 0 : index
    %90 = vector.load %arg8[%c0_119, %c0_120] : memref<4x8xf32, #tpu.memory_space<vmem>>, vector<4x8xf32>
    %cst_121 = arith.constant dense<0.000000e+00> : vector<64x8xf32>
    %91 = tpu.matmul %89, %90, %cst_121 {dimension_numbers = #tpu.dot_dimension_numbers<[1], [0], [0], [1], [0, 0, 1, 1], [], []>} : vector<64x4xf32>, vector<4x8xf32>, vector<64x8xf32> -> vector<64x8xf32>
    %c0_122 = arith.constant 0 : index
    %c0_123 = arith.constant 0 : index
    %92 = vector.load %arg9[%c0_122, %c0_123] : memref<1x8xf32, #tpu.memory_space<vmem>>, vector<1x8xf32>
    %93 = vector.broadcast %92 : vector<1x8xf32> to vector<64x8xf32>
    %94 = arith.mulf %91, %93 : vector<64x8xf32>
    %c0_124 = arith.constant 0 : index
    %c0_125 = arith.constant 0 : index
    %95 = vector.load %arg10[%c0_124, %c0_125] : memref<1x8xf32, #tpu.memory_space<vmem>>, vector<1x8xf32>
    %96 = vector.broadcast %95 : vector<1x8xf32> to vector<64x8xf32>
    %97 = arith.addf %94, %96 : vector<64x8xf32>
    %98 = arith.addf %87, %97 : vector<64x8xf32>
    %cst_126 = arith.constant 0.000000e+00 : f32
    %99 = vector.broadcast %cst_126 : f32 to vector<64x8xf32>
    %100 = arith.maximumf %98, %99 : vector<64x8xf32>
    %c0_127 = arith.constant 0 : index
    %c0_128 = arith.constant 0 : index
    %c0_129 = arith.constant 0 : index
    %101 = vector.load %arg11[%c0_127, %c0_128, %c0_129] : memref<1x64x8xf32, #tpu.memory_space<vmem>>, vector<1x64x8xf32>
    %102 = vector.shape_cast %101 : vector<1x64x8xf32> to vector<64x8xf32>
    %103 = vector.shape_cast %100 : vector<64x8xf32> to vector<1x64x8xf32>
    tpu.vector_store %arg11[%c0_127, %c0_128, %c0_129], %103 {strides = array<i32>} : memref<1x64x8xf32, #tpu.memory_space<vmem>>, vector<1x64x8xf32>,
    return
  }
  func.func @transform_0(%arg0: i32) -> (i32, i32, i32, i32) {
    %c0_i32 = arith.constant 0 : i32
    %c0_i32_0 = arith.constant 0 : i32
    %c0_i32_1 = arith.constant 0 : i32
    %c0_i32_2 = arith.constant 0 : i32
    return %arg0, %c0_i32, %c0_i32_0, %c0_i32_1 : i32, i32, i32, i32
  }
  func.func @transform_1(%arg0: i32) -> (i32, i32) {
    %c0_i32 = arith.constant 0 : i32
    %c0_i32_0 = arith.constant 0 : i32
    %c0_i32_1 = arith.constant 0 : i32
    return %c0_i32, %c0_i32_0 : i32, i32
  }
  func.func @transform_2(%arg0: i32) -> (i32, i32) {
    %c0_i32 = arith.constant 0 : i32
    %c0_i32_0 = arith.constant 0 : i32
    %c0_i32_1 = arith.constant 0 : i32
    return %c0_i32, %c0_i32_0 : i32, i32
  }
  func.func @transform_3(%arg0: i32) -> (i32, i32) {
    %c0_i32 = arith.constant 0 : i32
    %c0_i32_0 = arith.constant 0 : i32
    %c0_i32_1 = arith.constant 0 : i32
    return %c0_i32, %c0_i32_0 : i32, i32
  }
  func.func @transform_4(%arg0: i32) -> (i32, i32) {
    %c0_i32 = arith.constant 0 : i32
    %c0_i32_0 = arith.constant 0 : i32
    %c0_i32_1 = arith.constant 0 : i32
    return %c0_i32, %c0_i32_0 : i32, i32
  }
  func.func @transform_5(%arg0: i32) -> (i32, i32) {
    %c0_i32 = arith.constant 0 : i32
    %c0_i32_0 = arith.constant 0 : i32
    %c0_i32_1 = arith.constant 0 : i32
    return %c0_i32, %c0_i32_0 : i32, i32
  }
  func.func @transform_6(%arg0: i32) -> (i32, i32) {
    %c0_i32 = arith.constant 0 : i32
    %c0_i32_0 = arith.constant 0 : i32
    %c0_i32_1 = arith.constant 0 : i32
    return %c0_i32, %c0_i32_0 : i32, i32
  }
  func.func @transform_7(%arg0: i32) -> (i32, i32) {
    %c0_i32 = arith.constant 0 : i32
    %c0_i32_0 = arith.constant 0 : i32
    %c0_i32_1 = arith.constant 0 : i32
    return %c0_i32, %c0_i32_0 : i32, i32
  }
  func.func @transform_8(%arg0: i32) -> (i32, i32) {
    %c0_i32 = arith.constant 0 : i32
    %c0_i32_0 = arith.constant 0 : i32
    %c0_i32_1 = arith.constant 0 : i32
    return %c0_i32, %c0_i32_0 : i32, i32
  }
  func.func @transform_9(%arg0: i32) -> (i32, i32) {
    %c0_i32 = arith.constant 0 : i32
    %c0_i32_0 = arith.constant 0 : i32
    %c0_i32_1 = arith.constant 0 : i32
    return %c0_i32, %c0_i32_0 : i32, i32
  }
  func.func @transform_10(%arg0: i32) -> (i32, i32, i32) {
    %c0_i32 = arith.constant 0 : i32
    %c0_i32_0 = arith.constant 0 : i32
    %c0_i32_1 = arith.constant 0 : i32
    return %arg0, %c0_i32, %c0_i32_0 : i32, i32, i32
  }
}

</mosaic_0001>

<llo_original>
// kernel: tpu_custom_call.1
$region0: #{tpu_custom_call.1}
  #allocation0 [shape = 'u32[]', space=smem, size = 0x4, offset = 0x4, fixed_abs, tag = 'smem constant byte address 0x4 - core index']
  #allocation1 [shape = 'u32[144,128]{1,0:T(1,128)}', space=vmem, size = 0x12000, scoped, tag = 'internal scratch']
  #allocation2 [shape = 'f32[8,8,36]{2,1,0:T(8,128)}', space=vmem, size = 0x8000, scoped, tag = 'scratch operand']
  #allocation3 [shape = 'f32[8,8,72]{2,1,0:T(8,128)}', space=vmem, size = 0x8000, scoped, tag = 'scratch operand']
  %s0 = inlined_call_operand.vmem [shape: f32[2,36,9,4], index: 0, kind: input, shape index: {}]
  %s1 = inlined_call_operand.vmem [shape: f32[36,8], index: 1, kind: input, shape index: {}]
  %s2 = inlined_call_operand.vmem [shape: f32[72,8], index: 2, kind: input, shape index: {}]
  %s3 = inlined_call_operand.vmem [shape: f32[1,8], index: 3, kind: input, shape index: {}]
  %s4 = inlined_call_operand.vmem [shape: f32[1,8], index: 4, kind: input, shape index: {}]
  %s5 = inlined_call_operand.vmem [shape: f32[1,8], index: 5, kind: input, shape index: {}]
  %s6 = inlined_call_operand.vmem [shape: f32[1,8], index: 6, kind: input, shape index: {}]
  %s7 = inlined_call_operand.vmem [shape: f32[4,8], index: 7, kind: input, shape index: {}]
  %s8 = inlined_call_operand.vmem [shape: f32[1,8], index: 8, kind: input, shape index: {}]
  %s9 = inlined_call_operand.vmem [shape: f32[1,8], index: 9, kind: input, shape index: {}]
  %s10 = inlined_call_operand.vmem [shape: f32[2,64,8], index: 10, kind: output, shape index: {}]
  %s11 = sld [smem:[#allocation0]]
  $region73: #{tpu_custom_call.1} parent=0
    _
  %s13 = ssub.s32 1, %s11
  %s14 = scalar_select 0, %s13, %s11
  loop: start=0, step=1, limit=4
  $region2: #{tpu_custom_call.1} parent=0 // loop_pre_header
    _
  $region3: #{tpu_custom_call.1} parent=0 // loop_header
    %s16 = sphi 0, %s20
    %p17 = scmp.ge.s32.totalorder %s16, 4
    %s26 = sphi 0, %s28
    %s29 = sphi 0, %s26
    %s30 = sphi 0, %s29
    %s46 = sphi 0, %s30
    %s50 = sphi 0, %s50
    %s52 = sphi 0, %s50
    %s53 = sphi 0, %s52
    %s67 = sphi 0, %s53
    %s71 = sphi 0, %s71
    %s73 = sphi 0, %s71
    %s74 = sphi 0, %s73
    %s88 = sphi 0, %s74
    %s92 = sphi 0, %s92
    %s94 = sphi 0, %s92
    %s95 = sphi 0, %s94
    %s109 = sphi 0, %s95
    %s113 = sphi 0, %s113
    %s115 = sphi 0, %s113
    %s116 = sphi 0, %s115
    %s130 = sphi 0, %s116
    %s134 = sphi 0, %s134
    %s136 = sphi 0, %s134
    %s137 = sphi 0, %s136
    %s151 = sphi 0, %s137
    %s155 = sphi 0, %s155
    %s157 = sphi 0, %s155
    %s158 = sphi 0, %s157
    %s172 = sphi 0, %s158
    %s176 = sphi 0, %s176
    %s178 = sphi 0, %s176
    %s179 = sphi 0, %s178
    %s193 = sphi 0, %s179
    %s197 = sphi 0, %s197
    %s199 = sphi 0, %s197
    %s200 = sphi 0, %s199
    %s214 = sphi 0, %s200
    %s218 = sphi 0, %s218
    %s220 = sphi 0, %s218
    %s221 = sphi 0, %s220
    %s235 = sphi 0, %s221
    %s241 = sphi 0, %s243
    %s244 = sphi 0, %s241
    %s245 = sphi 0, %s244
    %s261 = sphi 0, %s245
  $region4: #{tpu_custom_call.1} parent=0 // loop_header_branch
    %19 = sbr.rel (%p17) target = $region8
  $region5: #{tpu_custom_call.1} parent=0 // loop_body
    %s21 = ssub.s32 %s16, 1
    %s22 = ssub.s32 %s16, 2
    %s23 = sadd.s32 %s16, 1
    %s24 = ssub.s32 %s16, %s23
    %p25 = scmp.eq.s32.totalorder %s24, 0
    %s27 = sadd.s32 %s26, 1
    %s28 = scalar_select %p25, %s26, %s27
    %p31 = pneg %p25
    %p32 = scmp.eq.s32.totalorder %s16, 1
    %p33 = por %p31, %p32
    %p34 = scmp.ne.s32.totalorder %s26, %s29
    %p35 = scmp.eq.s32.totalorder %s16, 0
    %p36 = por %p34, %p35
    %p37 = scmp.ne.s32.totalorder %s26, %s29
    %p38 = scmp.eq.s32.totalorder %s21, 1
    %p39 = por %p37, %p38
    %p40 = scmp.ne.s32.totalorder %s29, %s30
    %p41 = scmp.eq.s32.totalorder %s21, 0
    %p42 = por %p40, %p41
    %p43 = scmp.ne.s32.totalorder %s29, %s30
    %p44 = scmp.eq.s32.totalorder %s22, 1
    %p45 = por %p43, %p44
    %p47 = scmp.ne.s32.totalorder %s30, %s46
    %p48 = scmp.eq.s32.totalorder %s22, 0
    %p49 = por %p47, %p48
    %s51 = sadd.s32 %s50, 1
    %p54 = scmp.eq.s32.totalorder %s16, 1
    %p55 = scmp.ne.s32.totalorder %s50, %s52
    %p56 = scmp.eq.s32.totalorder %s16, 0
    %p57 = por %p55, %p56
    %p58 = scmp.ne.s32.totalorder %s50, %s52
    %p59 = scmp.eq.s32.totalorder %s21, 1
    %p60 = por %p58, %p59
    %p61 = scmp.ne.s32.totalorder %s52, %s53
    %p62 = scmp.eq.s32.totalorder %s21, 0
    %p63 = por %p61, %p62
    %p64 = scmp.ne.s32.totalorder %s52, %s53
    %p65 = scmp.eq.s32.totalorder %s22, 1
    %p66 = por %p64, %p65
    %p68 = scmp.ne.s32.totalorder %s53, %s67
    %p69 = scmp.eq.s32.totalorder %s22, 0
    %p70 = por %p68, %p69
    %s72 = sadd.s32 %s71, 1
    %p75 = scmp.eq.s32.totalorder %s16, 1
    %p76 = scmp.ne.s32.totalorder %s71, %s73
    %p77 = scmp.eq.s32.totalorder %s16, 0
    %p78 = por %p76, %p77
    %p79 = scmp.ne.s32.totalorder %s71, %s73
    %p80 = scmp.eq.s32.totalorder %s21, 1
    %p81 = por %p79, %p80
    %p82 = scmp.ne.s32.totalorder %s73, %s74
    %p83 = scmp.eq.s32.totalorder %s21, 0
    %p84 = por %p82, %p83
    %p85 = scmp.ne.s32.totalorder %s73, %s74
    %p86 = scmp.eq.s32.totalorder %s22, 1
    %p87 = por %p85, %p86
    %p89 = scmp.ne.s32.totalorder %s74, %s88
    %p90 = scmp.eq.s32.totalorder %s22, 0
    %p91 = por %p89, %p90
    %s93 = sadd.s32 %s92, 1
    %p96 = scmp.eq.s32.totalorder %s16, 1
    %p97 = scmp.ne.s32.totalorder %s92, %s94
    %p98 = scmp.eq.s32.totalorder %s16, 0
    %p99 = por %p97, %p98
    %p100 = scmp.ne.s32.totalorder %s92, %s94
    %p101 = scmp.eq.s32.totalorder %s21, 1
    %p102 = por %p100, %p101
    %p103 = scmp.ne.s32.totalorder %s94, %s95
    %p104 = scmp.eq.s32.totalorder %s21, 0
    %p105 = por %p103, %p104
    %p106 = scmp.ne.s32.totalorder %s94, %s95
    %p107 = scmp.eq.s32.totalorder %s22, 1
    %p108 = por %p106, %p107
    %p110 = scmp.ne.s32.totalorder %s95, %s109
    %p111 = scmp.eq.s32.totalorder %s22, 0
    %p112 = por %p110, %p111
    %s114 = sadd.s32 %s113, 1
    %p117 = scmp.eq.s32.totalorder %s16, 1
    %p118 = scmp.ne.s32.totalorder %s113, %s115
    %p119 = scmp.eq.s32.totalorder %s16, 0
    %p120 = por %p118, %p119
    %p121 = scmp.ne.s32.totalorder %s113, %s115
    %p122 = scmp.eq.s32.totalorder %s21, 1
    %p123 = por %p121, %p122
    %p124 = scmp.ne.s32.totalorder %s115, %s116
    %p125 = scmp.eq.s32.totalorder %s21, 0
    %p126 = por %p124, %p125
    %p127 = scmp.ne.s32.totalorder %s115, %s116
    %p128 = scmp.eq.s32.totalorder %s22, 1
    %p129 = por %p127, %p128
    %p131 = scmp.ne.s32.totalorder %s116, %s130
    %p132 = scmp.eq.s32.totalorder %s22, 0
    %p133 = por %p131, %p132
    %s135 = sadd.s32 %s134, 1
    %p138 = scmp.eq.s32.totalorder %s16, 1
    %p139 = scmp.ne.s32.totalorder %s134, %s136
    %p140 = scmp.eq.s32.totalorder %s16, 0
    %p141 = por %p139, %p140
    %p142 = scmp.ne.s32.totalorder %s134, %s136
    %p143 = scmp.eq.s32.totalorder %s21, 1
    %p144 = por %p142, %p143
    %p145 = scmp.ne.s32.totalorder %s136, %s137
    %p146 = scmp.eq.s32.totalorder %s21, 0
    %p147 = por %p145, %p146
    %p148 = scmp.ne.s32.totalorder %s136, %s137
    %p149 = scmp.eq.s32.totalorder %s22, 1
    %p150 = por %p148, %p149
    %p152 = scmp.ne.s32.totalorder %s137, %s151
    %p153 = scmp.eq.s32.totalorder %s22, 0
    %p154 = por %p152, %p153
    %s156 = sadd.s32 %s155, 1
    %p159 = scmp.eq.s32.totalorder %s16, 1
    %p160 = scmp.ne.s32.totalorder %s155, %s157
    %p161 = scmp.eq.s32.totalorder %s16, 0
    %p162 = por %p160, %p161
    %p163 = scmp.ne.s32.totalorder %s155, %s157
    %p164 = scmp.eq.s32.totalorder %s21, 1
    %p165 = por %p163, %p164
    %p166 = scmp.ne.s32.totalorder %s157, %s158
    %p167 = scmp.eq.s32.totalorder %s21, 0
    %p168 = por %p166, %p167
    %p169 = scmp.ne.s32.totalorder %s157, %s158
    %p170 = scmp.eq.s32.totalorder %s22, 1
    %p171 = por %p169, %p170
    %p173 = scmp.ne.s32.totalorder %s158, %s172
    %p174 = scmp.eq.s32.totalorder %s22, 0
    %p175 = por %p173, %p174
    %s177 = sadd.s32 %s176, 1
    %p180 = scmp.eq.s32.totalorder %s16, 1
    %p181 = scmp.ne.s32.totalorder %s176, %s178
    %p182 = scmp.eq.s32.totalorder %s16, 0
    %p183 = por %p181, %p182
    %p184 = scmp.ne.s32.totalorder %s176, %s178
    %p185 = scmp.eq.s32.totalorder %s21, 1
    %p186 = por %p184, %p185
    %p187 = scmp.ne.s32.totalorder %s178, %s179
    %p188 = scmp.eq.s32.totalorder %s21, 0
    %p189 = por %p187, %p188
    %p190 = scmp.ne.s32.totalorder %s178, %s179
    %p191 = scmp.eq.s32.totalorder %s22, 1
    %p192 = por %p190, %p191
    %p194 = scmp.ne.s32.totalorder %s179, %s193
    %p195 = scmp.eq.s32.totalorder %s22, 0
    %p196 = por %p194, %p195
    %s198 = sadd.s32 %s197, 1
    %p201 = scmp.eq.s32.totalorder %s16, 1
    %p202 = scmp.ne.s32.totalorder %s197, %s199
    %p203 = scmp.eq.s32.totalorder %s16, 0
    %p204 = por %p202, %p203
    %p205 = scmp.ne.s32.totalorder %s197, %s199
    %p206 = scmp.eq.s32.totalorder %s21, 1
    %p207 = por %p205, %p206
    %p208 = scmp.ne.s32.totalorder %s199, %s200
    %p209 = scmp.eq.s32.totalorder %s21, 0
    %p210 = por %p208, %p209
    %p211 = scmp.ne.s32.totalorder %s199, %s200
    %p212 = scmp.eq.s32.totalorder %s22, 1
    %p213 = por %p211, %p212
    %p215 = scmp.ne.s32.totalorder %s200, %s214
    %p216 = scmp.eq.s32.totalorder %s22, 0
    %p217 = por %p215, %p216
    %s219 = sadd.s32 %s218, 1
    %p222 = scmp.eq.s32.totalorder %s16, 1
    %p223 = scmp.ne.s32.totalorder %s218, %s220
    %p224 = scmp.eq.s32.totalorder %s16, 0
    %p225 = por %p223, %p224
    %p226 = scmp.ne.s32.totalorder %s218, %s220
    %p227 = scmp.eq.s32.totalorder %s21, 1
    %p228 = por %p226, %p227
    %p229 = scmp.ne.s32.totalorder %s220, %s221
    %p230 = scmp.eq.s32.totalorder %s21, 0
    %p231 = por %p229, %p230
    %p232 = scmp.ne.s32.totalorder %s220, %s221
    %p233 = scmp.eq.s32.totalorder %s22, 1
    %p234 = por %p232, %p233
    %p236 = scmp.ne.s32.totalorder %s221, %s235
    %p237 = scmp.eq.s32.totalorder %s22, 0
    %p238 = por %p236, %p237
    %s239 = ssub.s32 %s16, %s23
    %p240 = scmp.eq.s32.totalorder %s239, 0
    %s242 = sadd.s32 %s241, 1
    %s243 = scalar_select %p240, %s241, %s242
    %p246 = pneg %p240
    %p247 = scmp.eq.s32.totalorder %s16, 1
    %p248 = por %p246, %p247
    %p249 = scmp.ne.s32.totalorder %s241, %s244
    %p250 = scmp.eq.s32.totalorder %s16, 0
    %p251 = por %p249, %p250
    %p252 = scmp.ne.s32.totalorder %s241, %s244
    %p253 = scmp.eq.s32.totalorder %s21, 1
    %p254 = por %p252, %p253
    %p255 = scmp.ne.s32.totalorder %s244, %s245
    %p256 = scmp.eq.s32.totalorder %s21, 0
    %p257 = por %p255, %p256
    %p258 = scmp.ne.s32.totalorder %s244, %s245
    %p259 = scmp.eq.s32.totalorder %s22, 1
    %p260 = por %p258, %p259
    %p262 = scmp.ne.s32.totalorder %s245, %s261
    %p263 = scmp.eq.s32.totalorder %s22, 0
    %p264 = por %p262, %p263
    %p265 = scmp.le.s32.totalorder 1, %s16
    %p266 = scmp.lt.s32.totalorder %s16, 3
    %p267 = pnand %p265, %p266
    %p268 = pneg %p267
    // Predicated region
    $region9: #{tpu_custom_call.1} parent=5 // pred_check
      _
    $region10: #{tpu_custom_call.1} parent=5 // pred_check_branch
      %270 = sbr.rel (%p267) target = $region12
    $region11: #{tpu_custom_call.1} parent=5 // pred_region
      %s271 = ssub.s32 %s16, 1
      // Predicated region
      $region13: #{tpu_custom_call.1} parent=11 // pred_check
        %p272 = pneg %p63
      $region14: #{tpu_custom_call.1} parent=11 // pred_check_branch
        %274 = sbr.rel (%p272) target = $region16
      $region15: #{tpu_custom_call.1} parent=11 // pred_region
        _
      $region16: #{tpu_custom_call.1} parent=11 // pred_fallthru
        _
      // Predicated region
      $region17: #{tpu_custom_call.1} parent=11 // pred_check
        %p275 = pneg %p84
      $region18: #{tpu_custom_call.1} parent=11 // pred_check_branch
        %277 = sbr.rel (%p275) target = $region20
      $region19: #{tpu_custom_call.1} parent=11 // pred_region
        _
      $region20: #{tpu_custom_call.1} parent=11 // pred_fallthru
        _
      // Predicated region
      $region21: #{tpu_custom_call.1} parent=11 // pred_check
        %p278 = pneg %p105
      $region22: #{tpu_custom_call.1} parent=11 // pred_check_branch
        %280 = sbr.rel (%p278) target = $region24
      $region23: #{tpu_custom_call.1} parent=11 // pred_region
        _
      $region24: #{tpu_custom_call.1} parent=11 // pred_fallthru
        _
      // Predicated region
      $region25: #{tpu_custom_call.1} parent=11 // pred_check
        %p281 = pneg %p126
      $region26: #{tpu_custom_call.1} parent=11 // pred_check_branch
        %283 = sbr.rel (%p281) target = $region28
      $region27: #{tpu_custom_call.1} parent=11 // pred_region
        _
      $region28: #{tpu_custom_call.1} parent=11 // pred_fallthru
        _
      // Predicated region
      $region29: #{tpu_custom_call.1} parent=11 // pred_check
        %p284 = pneg %p147
      $region30: #{tpu_custom_call.1} parent=11 // pred_check_branch
        %286 = sbr.rel (%p284) target = $region32
      $region31: #{tpu_custom_call.1} parent=11 // pred_region
        _
      $region32: #{tpu_custom_call.1} parent=11 // pred_fallthru
        _
      // Predicated region
      $region33: #{tpu_custom_call.1} parent=11 // pred_check
        %p287 = pneg %p168
      $region34: #{tpu_custom_call.1} parent=11 // pred_check_branch
        %289 = sbr.rel (%p287) target = $region36
      $region35: #{tpu_custom_call.1} parent=11 // pred_region
        _
      $region36: #{tpu_custom_call.1} parent=11 // pred_fallthru
        _
      // Predicated region
      $region37: #{tpu_custom_call.1} parent=11 // pred_check
        %p290 = pneg %p189
      $region38: #{tpu_custom_call.1} parent=11 // pred_check_branch
        %292 = sbr.rel (%p290) target = $region40
      $region39: #{tpu_custom_call.1} parent=11 // pred_region
        _
      $region40: #{tpu_custom_call.1} parent=11 // pred_fallthru
        _
      // Predicated region
      $region41: #{tpu_custom_call.1} parent=11 // pred_check
        %p293 = pneg %p210
      $region42: #{tpu_custom_call.1} parent=11 // pred_check_branch
        %295 = sbr.rel (%p293) target = $region44
      $region43: #{tpu_custom_call.1} parent=11 // pred_region
        _
      $region44: #{tpu_custom_call.1} parent=11 // pred_fallthru
        _
      // Predicated region
      $region45: #{tpu_custom_call.1} parent=11 // pred_check
        %p296 = pneg %p231
      $region46: #{tpu_custom_call.1} parent=11 // pred_check_branch
        %298 = sbr.rel (%p296) target = $region48
      $region47: #{tpu_custom_call.1} parent=11 // pred_region
        _
      $region48: #{tpu_custom_call.1} parent=11 // pred_fallthru
        _
    $region12: #{tpu_custom_call.1} parent=5 // pred_fallthru
      _
    %p299 = scmp.lt.s32.totalorder %s16, 2
    // Predicated region
    $region49: #{tpu_custom_call.1} parent=5 // pred_check
      %p300 = pneg %p299
    $region50: #{tpu_custom_call.1} parent=5 // pred_check_branch
      %302 = sbr.rel (%p300) target = $region52
    $region51: #{tpu_custom_call.1} parent=5 // pred_region
      // Predicated region
      $region53: #{tpu_custom_call.1} parent=51 // pred_check
        %p303 = pneg %p36
      $region54: #{tpu_custom_call.1} parent=51 // pred_check_branch
        %305 = sbr.rel (%p303) target = $region56
      $region55: #{tpu_custom_call.1} parent=51 // pred_region
        %p306 = scmp.lt.s32.totalorder %s16, 1
        %s307 = scalar_select %p306, %s16, 1
        %s308 = smul.addr %s307, 72
        %s309 = smul.addr %s308, 8
        %s310 = scalar_lea.vmem %s0, %s309
      $region56: #{tpu_custom_call.1} parent=51 // pred_fallthru
        _
    $region52: #{tpu_custom_call.1} parent=5 // pred_fallthru
      _
    %p311 = scmp.le.s32.totalorder 1, %s16
    %p312 = scmp.lt.s32.totalorder %s16, 3
    %p313 = pnand %p311, %p312
    %p314 = pneg %p313
    // Predicated region
    $region57: #{tpu_custom_call.1} parent=5 // pred_check
      _
    $region58: #{tpu_custom_call.1} parent=5 // pred_check_branch
      %316 = sbr.rel (%p313) target = $region60
    $region59: #{tpu_custom_call.1} parent=5 // pred_region
      %s317 = ssub.s32 %s16, 1
      %p318 = scmp.lt.s32.totalorder %s21, 1
      %s319 = scalar_select %p318, %s21, 1
      %s320 = smul.addr %s319, 72
      %s321 = smul.addr %s320, 8
      %s322 = scalar_lea.vmem %s0, %s321
      %p323 = pneg %p42
      %p324 = pneg %p39
      %p325 = pneg %p63
      %p326 = pneg %p60
      %p327 = pneg %p84
      %p328 = pneg %p81
      %p329 = pneg %p105
      %p330 = pneg %p102
      %p331 = pneg %p126
      %p332 = pneg %p123
      %p333 = pneg %p147
      %p334 = pneg %p144
      %p335 = pneg %p168
      %p336 = pneg %p165
      %p337 = pneg %p189
      %p338 = pneg %p186
      %p339 = pneg %p210
      %p340 = pneg %p207
      %p341 = pneg %p231
      %p342 = pneg %p228
      %p343 = pneg %p257
      %p344 = pneg %p254
      %p345 = scmp.lt.s32.totalorder %s21, 1
      %s346 = scalar_select %p345, %s21, 1
      %s347 = smul.addr %s346, 8
      %s348 = smul.addr %s347, 8
      %s349 = scalar_lea.vmem %s10, %s348
      %p350 = scmp.lt.s32.totalorder %s21, 1
      %s351 = scalar_select %p350, %s21, 1
      %s352 = smul.addr %s351, 72
      %s353 = smul.addr %s352, 8
      %s354 = scalar_lea.vmem %s0, %s353
      %p355 = scmp.lt.s32.totalorder %s21, 1
      %s356 = scalar_select %p355, %s21, 1
      %s357 = smul.addr %s356, 8
      %s358 = smul.addr %s357, 8
      %s359 = scalar_lea.vmem %s10, %s358
      %v360 = vld [vmem:[%s354] sm:$0xff]
      %v361 = vld [vmem:[%s354 + $0x8] sm:$0x1]
      %v362 = vld [vmem:[%s354 + $0x10] sm:$0xff]
      %v363 = vld [vmem:[%s354 + $0x18] sm:$0x1]
      %v364 = vld [vmem:[%s354 + $0x20] sm:$0xff]
      %v365 = vld [vmem:[%s354 + $0x28] sm:$0x1]
      %v366 = vld [vmem:[%s354 + $0x30] sm:$0xff]
      %v367 = vld [vmem:[%s354 + $0x38] sm:$0x1]
      %v368 = vld [vmem:[%s354 + $0x40] sm:$0xff]
      %v369 = vld [vmem:[%s354 + $0x48] sm:$0x1]
      %v370 = vld [vmem:[%s354 + $0x50] sm:$0xff]
      %v371 = vld [vmem:[%s354 + $0x58] sm:$0x1]
      %v372 = vld [vmem:[%s354 + $0x60] sm:$0xff]
      %v373 = vld [vmem:[%s354 + $0x68] sm:$0x1]
      %v374 = vld [vmem:[%s354 + $0x70] sm:$0xff]
      %v375 = vld [vmem:[%s354 + $0x78] sm:$0x1]
      %v376 = vld [vmem:[%s354 + $0x80] sm:$0xff]
      %v377 = vld [vmem:[%s354 + $0x88] sm:$0x1]
      %s378 = scalar_lea.vmem %s354, 144
      %v379 = vld [vmem:[%s378] sm:$0xff]
      %v380 = vld [vmem:[%s378 + $0x10] sm:$0xff]
      %v381 = vld [vmem:[%s378 + $0x20] sm:$0xff]
      %v382 = vld [vmem:[%s378 + $0x30] sm:$0xff]
      %v383 = vld [vmem:[%s378 + $0x40] sm:$0xff]
      %v384 = vld [vmem:[%s378 + $0x50] sm:$0xff]
      %v385 = vld [vmem:[%s378 + $0x60] sm:$0xff]
      %v386 = vld [vmem:[%s378 + $0x70] sm:$0xff]
      %v387 = vld [vmem:[%s378 + $0x80] sm:$0xff]
      %s388 = scalar_lea.vmem %s354, 288
      %v389 = vld [vmem:[%s388] sm:$0xff]
      %v390 = vld [vmem:[%s388 + $0x8] sm:$0x1]
      %v391 = vld [vmem:[%s388 + $0x10] sm:$0xff]
      %v392 = vld [vmem:[%s388 + $0x18] sm:$0x1]
      %v393 = vld [vmem:[%s388 + $0x20] sm:$0xff]
      %v394 = vld [vmem:[%s388 + $0x28] sm:$0x1]
      %v395 = vld [vmem:[%s388 + $0x30] sm:$0xff]
      %v396 = vld [vmem:[%s388 + $0x38] sm:$0x1]
      %v397 = vld [vmem:[%s388 + $0x40] sm:$0xff]
      %v398 = vld [vmem:[%s388 + $0x48] sm:$0x1]
      %v399 = vld [vmem:[%s388 + $0x50] sm:$0xff]
      %v400 = vld [vmem:[%s388 + $0x58] sm:$0x1]
      %v401 = vld [vmem:[%s388 + $0x60] sm:$0xff]
      %v402 = vld [vmem:[%s388 + $0x68] sm:$0x1]
      %v403 = vld [vmem:[%s388 + $0x70] sm:$0xff]
      %v404 = vld [vmem:[%s388 + $0x78] sm:$0x1]
      %s405 = scalar_lea.vmem %s354, 432
      %v406 = vld [vmem:[%s405] sm:$0xff]
      %v407 = vld [vmem:[%s405 + $0x10] sm:$0xff]
      %v408 = vld [vmem:[%s405 + $0x20] sm:$0xff]
      %v409 = vld [vmem:[%s405 + $0x30] sm:$0xff]
      %v410 = vld [vmem:[%s405 + $0x40] sm:$0xff]
      %v411 = vld [vmem:[%s405 + $0x50] sm:$0xff]
      %v412 = vld [vmem:[%s405 + $0x60] sm:$0xff]
      %v413 = vld [vmem:[%s405 + $0x70] sm:$0xff]
      %vm414 = vcmask 31744
      %415 = vst.msk [vmem:[#allocation2] sm:$0xff] %vm414, %v360
      %416 = vst.msk [vmem:[#allocation2 + $0x8] sm:$0xff] %vm414, %v362
      %417 = vst.msk [vmem:[#allocation2 + $0x10] sm:$0xff] %vm414, %v364
      %418 = vst.msk [vmem:[#allocation2 + $0x18] sm:$0xff] %vm414, %v366
      %419 = vst.msk [vmem:[#allocation2 + $0x20] sm:$0xff] %vm414, %v368
      %420 = vst.msk [vmem:[#allocation2 + $0x28] sm:$0xff] %vm414, %v370
      %421 = vst.msk [vmem:[#allocation2 + $0x30] sm:$0xff] %vm414, %v372
      %422 = vst.msk [vmem:[#allocation2 + $0x38] sm:$0xff] %vm414, %v374
      %431 = vrot.lane.b32.xlu0 %v379, 4
      %v432 = vpop.permute.xlu0 %431
      %433 = vrot.lane.b32.xlu0 %v380, 4
      %v434 = vpop.permute.xlu0 %433
      %435 = vrot.lane.b32.xlu0 %v381, 4
      %v436 = vpop.permute.xlu0 %435
      %437 = vrot.lane.b32.xlu0 %v382, 4
      %v438 = vpop.permute.xlu0 %437
      %439 = vrot.lane.b32.xlu0 %v383, 4
      %v440 = vpop.permute.xlu0 %439
      %441 = vrot.lane.b32.xlu0 %v384, 4
      %v442 = vpop.permute.xlu0 %441
      %443 = vrot.lane.b32.xlu0 %v385, 4
      %v444 = vpop.permute.xlu0 %443
      %445 = vrot.lane.b32.xlu0 %v386, 4
      %v446 = vpop.permute.xlu0 %445
      %vm455 = vcmask 64544
      %456 = vst.msk [vmem:[#allocation2] sm:$0xff] %vm455, %v432
      %457 = vst.msk [vmem:[#allocation2 + $0x8] sm:$0xff] %vm455, %v434
      %458 = vst.msk [vmem:[#allocation2 + $0x10] sm:$0xff] %vm455, %v436
      %459 = vst.msk [vmem:[#allocation2 + $0x18] sm:$0xff] %vm455, %v438
      %460 = vst.msk [vmem:[#allocation2 + $0x20] sm:$0xff] %vm455, %v440
      %461 = vst.msk [vmem:[#allocation2 + $0x28] sm:$0xff] %vm455, %v442
      %462 = vst.msk [vmem:[#allocation2 + $0x30] sm:$0xff] %vm455, %v444
      %463 = vst.msk [vmem:[#allocation2 + $0x38] sm:$0xff] %vm455, %v446
      %480 = vrot.lane.b32.xlu0 %v360, 8
      %v481 = vpop.permute.xlu0 %480
      %482 = vrot.lane.b32.xlu0 %v361, 8
      %v483 = vpop.permute.xlu0 %482
      %484 = vrot.lane.b32.xlu0 %v362, 8
      %v485 = vpop.permute.xlu0 %484
      %486 = vrot.lane.b32.xlu0 %v363, 8
      %v487 = vpop.permute.xlu0 %486
      %488 = vrot.lane.b32.xlu0 %v364, 8
      %v489 = vpop.permute.xlu0 %488
      %490 = vrot.lane.b32.xlu0 %v365, 8
      %v491 = vpop.permute.xlu0 %490
      %492 = vrot.lane.b32.xlu0 %v366, 8
      %v493 = vpop.permute.xlu0 %492
      %494 = vrot.lane.b32.xlu0 %v367, 8
      %v495 = vpop.permute.xlu0 %494
      %496 = vrot.lane.b32.xlu0 %v368, 8
      %v497 = vpop.permute.xlu0 %496
      %498 = vrot.lane.b32.xlu0 %v369, 8
      %v499 = vpop.permute.xlu0 %498
      %500 = vrot.lane.b32.xlu0 %v370, 8
      %v501 = vpop.permute.xlu0 %500
      %502 = vrot.lane.b32.xlu0 %v371, 8
      %v503 = vpop.permute.xlu0 %502
      %504 = vrot.lane.b32.xlu0 %v372, 8
      %v505 = vpop.permute.xlu0 %504
      %506 = vrot.lane.b32.xlu0 %v373, 8
      %v507 = vpop.permute.xlu0 %506
      %508 = vrot.lane.b32.xlu0 %v374, 8
      %v509 = vpop.permute.xlu0 %508
      %510 = vrot.lane.b32.xlu0 %v375, 8
      %v511 = vpop.permute.xlu0 %510
      %vm528 = vcmask 97345
      %529 = vst.msk [vmem:[#allocation2 - $0x1] sm:$0xfe] %vm528, %v481
      %vm530 = vcmask 90176
      %531 = vst.msk [vmem:[#allocation2 + $0x7] sm:$0x1] %vm530, %v483
      %532 = vst.msk [vmem:[#allocation2 + $0x7] sm:$0xfe] %vm528, %v485
      %533 = vst.msk [vmem:[#allocation2 + $0xf] sm:$0x1] %vm530, %v487
      %534 = vst.msk [vmem:[#allocation2 + $0xf] sm:$0xfe] %vm528, %v489
      %535 = vst.msk [vmem:[#allocation2 + $0x17] sm:$0x1] %vm530, %v491
      %536 = vst.msk [vmem:[#allocation2 + $0x17] sm:$0xfe] %vm528, %v493
      %537 = vst.msk [vmem:[#allocation2 + $0x1f] sm:$0x1] %vm530, %v495
      %538 = vst.msk [vmem:[#allocation2 + $0x1f] sm:$0xfe] %vm528, %v497
      %539 = vst.msk [vmem:[#allocation2 + $0x27] sm:$0x1] %vm530, %v499
      %540 = vst.msk [vmem:[#allocation2 + $0x27] sm:$0xfe] %vm528, %v501
      %541 = vst.msk [vmem:[#allocation2 + $0x2f] sm:$0x1] %vm530, %v503
      %542 = vst.msk [vmem:[#allocation2 + $0x2f] sm:$0xfe] %vm528, %v505
      %543 = vst.msk [vmem:[#allocation2 + $0x37] sm:$0x1] %vm530, %v507
      %544 = vst.msk [vmem:[#allocation2 + $0x37] sm:$0xfe] %vm528, %v509
      %545 = vst.msk [vmem:[#allocation2 + $0x3f] sm:$0x1] %vm530, %v511
      %554 = vrot.lane.b32.xlu0 %v389, 12
      %v555 = vpop.permute.xlu0 %554
      %556 = vrot.lane.b32.xlu0 %v391, 12
      %v557 = vpop.permute.xlu0 %556
      %558 = vrot.lane.b32.xlu0 %v393, 12
      %v559 = vpop.permute.xlu0 %558
      %560 = vrot.lane.b32.xlu0 %v395, 12
      %v561 = vpop.permute.xlu0 %560
      %562 = vrot.lane.b32.xlu0 %v397, 12
      %v563 = vpop.permute.xlu0 %562
      %564 = vrot.lane.b32.xlu0 %v399, 12
      %v565 = vpop.permute.xlu0 %564
      %566 = vrot.lane.b32.xlu0 %v401, 12
      %v567 = vpop.permute.xlu0 %566
      %568 = vrot.lane.b32.xlu0 %v403, 12
      %v569 = vpop.permute.xlu0 %568
      %vm578 = vcmask 130144
      %579 = vst.msk [vmem:[#allocation2] sm:$0xff] %vm578, %v555
      %580 = vst.msk [vmem:[#allocation2 + $0x8] sm:$0xff] %vm578, %v557
      %581 = vst.msk [vmem:[#allocation2 + $0x10] sm:$0xff] %vm578, %v559
      %582 = vst.msk [vmem:[#allocation2 + $0x18] sm:$0xff] %vm578, %v561
      %583 = vst.msk [vmem:[#allocation2 + $0x20] sm:$0xff] %vm578, %v563
      %584 = vst.msk [vmem:[#allocation2 + $0x28] sm:$0xff] %vm578, %v565
      %585 = vst.msk [vmem:[#allocation2 + $0x30] sm:$0xff] %vm578, %v567
      %586 = vst.msk [vmem:[#allocation2 + $0x38] sm:$0xff] %vm578, %v569
      %595 = vrot.lane.b32.xlu0 %v406, 16
      %v596 = vpop.permute.xlu0 %595
      %597 = vrot.lane.b32.xlu0 %v407, 16
      %v598 = vpop.permute.xlu0 %597
      %599 = vrot.lane.b32.xlu0 %v408, 16
      %v600 = vpop.permute.xlu0 %599
      %601 = vrot.lane.b32.xlu0 %v409, 16
      %v602 = vpop.permute.xlu0 %601
      %603 = vrot.lane.b32.xlu0 %v410, 16
      %v604 = vpop.permute.xlu0 %603
      %605 = vrot.lane.b32.xlu0 %v411, 16
      %v606 = vpop.permute.xlu0 %605
      %607 = vrot.lane.b32.xlu0 %v412, 16
      %v608 = vpop.permute.xlu0 %607
      %609 = vrot.lane.b32.xlu0 %v413, 16
      %v610 = vpop.permute.xlu0 %609
      %vm619 = vcmask 162944
      %620 = vst.msk [vmem:[#allocation2] sm:$0xff] %vm619, %v596
      %621 = vst.msk [vmem:[#allocation2 + $0x8] sm:$0xff] %vm619, %v598
      %622 = vst.msk [vmem:[#allocation2 + $0x10] sm:$0xff] %vm619, %v600
      %623 = vst.msk [vmem:[#allocation2 + $0x18] sm:$0xff] %vm619, %v602
      %624 = vst.msk [vmem:[#allocation2 + $0x20] sm:$0xff] %vm619, %v604
      %625 = vst.msk [vmem:[#allocation2 + $0x28] sm:$0xff] %vm619, %v606
      %626 = vst.msk [vmem:[#allocation2 + $0x30] sm:$0xff] %vm619, %v608
      %627 = vst.msk [vmem:[#allocation2 + $0x38] sm:$0xff] %vm619, %v610
      %636 = vrot.lane.b32.xlu0 %v389, 20
      %v637 = vpop.permute.xlu0 %636
      %638 = vrot.lane.b32.xlu0 %v390, 20
      %v639 = vpop.permute.xlu0 %638
      %640 = vrot.lane.b32.xlu0 %v391, 20
      %v641 = vpop.permute.xlu0 %640
      %642 = vrot.lane.b32.xlu0 %v392, 20
      %v643 = vpop.permute.xlu0 %642
      %644 = vrot.lane.b32.xlu0 %v393, 20
      %v645 = vpop.permute.xlu0 %644
      %646 = vrot.lane.b32.xlu0 %v394, 20
      %v647 = vpop.permute.xlu0 %646
      %648 = vrot.lane.b32.xlu0 %v395, 20
      %v649 = vpop.permute.xlu0 %648
      %650 = vrot.lane.b32.xlu0 %v396, 20
      %v651 = vpop.permute.xlu0 %650
      %652 = vrot.lane.b32.xlu0 %v397, 20
      %v653 = vpop.permute.xlu0 %652
      %654 = vrot.lane.b32.xlu0 %v398, 20
      %v655 = vpop.permute.xlu0 %654
      %656 = vrot.lane.b32.xlu0 %v399, 20
      %v657 = vpop.permute.xlu0 %656
      %658 = vrot.lane.b32.xlu0 %v400, 20
      %v659 = vpop.permute.xlu0 %658
      %660 = vrot.lane.b32.xlu0 %v401, 20
      %v661 = vpop.permute.xlu0 %660
      %662 = vrot.lane.b32.xlu0 %v402, 20
      %v663 = vpop.permute.xlu0 %662
      %664 = vrot.lane.b32.xlu0 %v403, 20
      %v665 = vpop.permute.xlu0 %664
      %666 = vrot.lane.b32.xlu0 %v404, 20
      %v667 = vpop.permute.xlu0 %666
      %vm684 = vcmask 195745
      %685 = vst.msk [vmem:[#allocation2 - $0x1] sm:$0xfe] %vm684, %v637
      %vm686 = vcmask 188576
      %687 = vst.msk [vmem:[#allocation2 + $0x7] sm:$0x1] %vm686, %v639
      %688 = vst.msk [vmem:[#allocation2 + $0x7] sm:$0xfe] %vm684, %v641
      %689 = vst.msk [vmem:[#allocation2 + $0xf] sm:$0x1] %vm686, %v643
      %690 = vst.msk [vmem:[#allocation2 + $0xf] sm:$0xfe] %vm684, %v645
      %691 = vst.msk [vmem:[#allocation2 + $0x17] sm:$0x1] %vm686, %v647
      %692 = vst.msk [vmem:[#allocation2 + $0x17] sm:$0xfe] %vm684, %v649
      %693 = vst.msk [vmem:[#allocation2 + $0x1f] sm:$0x1] %vm686, %v651
      %694 = vst.msk [vmem:[#allocation2 + $0x1f] sm:$0xfe] %vm684, %v653
      %695 = vst.msk [vmem:[#allocation2 + $0x27] sm:$0x1] %vm686, %v655
      %696 = vst.msk [vmem:[#allocation2 + $0x27] sm:$0xfe] %vm684, %v657
      %697 = vst.msk [vmem:[#allocation2 + $0x2f] sm:$0x1] %vm686, %v659
      %698 = vst.msk [vmem:[#allocation2 + $0x2f] sm:$0xfe] %vm684, %v661
      %699 = vst.msk [vmem:[#allocation2 + $0x37] sm:$0x1] %vm686, %v663
      %700 = vst.msk [vmem:[#allocation2 + $0x37] sm:$0xfe] %vm684, %v665
      %701 = vst.msk [vmem:[#allocation2 + $0x3f] sm:$0x1] %vm686, %v667
      %703 = vrot.lane.b32.xlu0 %v362, 24
      %v704 = vpop.permute.xlu0 %703
      %705 = vrot.lane.b32.xlu0 %v364, 24
      %v706 = vpop.permute.xlu0 %705
      %707 = vrot.lane.b32.xlu0 %v366, 24
      %v708 = vpop.permute.xlu0 %707
      %709 = vrot.lane.b32.xlu0 %v368, 24
      %v710 = vpop.permute.xlu0 %709
      %711 = vrot.lane.b32.xlu0 %v370, 24
      %v712 = vpop.permute.xlu0 %711
      %713 = vrot.lane.b32.xlu0 %v372, 24
      %v714 = vpop.permute.xlu0 %713
      %715 = vrot.lane.b32.xlu0 %v374, 24
      %v716 = vpop.permute.xlu0 %715
      %717 = vrot.lane.b32.xlu0 %v376, 24
      %v718 = vpop.permute.xlu0 %717
      %vm727 = vcmask 228544
      %728 = vst.msk [vmem:[#allocation2] sm:$0xff] %vm727, %v704
      %729 = vst.msk [vmem:[#allocation2 + $0x8] sm:$0xff] %vm727, %v706
      %730 = vst.msk [vmem:[#allocation2 + $0x10] sm:$0xff] %vm727, %v708
      %731 = vst.msk [vmem:[#allocation2 + $0x18] sm:$0xff] %vm727, %v710
      %732 = vst.msk [vmem:[#allocation2 + $0x20] sm:$0xff] %vm727, %v712
      %733 = vst.msk [vmem:[#allocation2 + $0x28] sm:$0xff] %vm727, %v714
      %734 = vst.msk [vmem:[#allocation2 + $0x30] sm:$0xff] %vm727, %v716
      %735 = vst.msk [vmem:[#allocation2 + $0x38] sm:$0xff] %vm727, %v718
      %737 = vrot.lane.b32.xlu0 %v380, 28
      %v738 = vpop.permute.xlu0 %737
      %739 = vrot.lane.b32.xlu0 %v381, 28
      %v740 = vpop.permute.xlu0 %739
      %741 = vrot.lane.b32.xlu0 %v382, 28
      %v742 = vpop.permute.xlu0 %741
      %743 = vrot.lane.b32.xlu0 %v383, 28
      %v744 = vpop.permute.xlu0 %743
      %745 = vrot.lane.b32.xlu0 %v384, 28
      %v746 = vpop.permute.xlu0 %745
      %747 = vrot.lane.b32.xlu0 %v385, 28
      %v748 = vpop.permute.xlu0 %747
      %749 = vrot.lane.b32.xlu0 %v386, 28
      %v750 = vpop.permute.xlu0 %749
      %751 = vrot.lane.b32.xlu0 %v387, 28
      %v752 = vpop.permute.xlu0 %751
      %vm761 = vcmask 261344
      %762 = vst.msk [vmem:[#allocation2] sm:$0xff] %vm761, %v738
      %763 = vst.msk [vmem:[#allocation2 + $0x8] sm:$0xff] %vm761, %v740
      %764 = vst.msk [vmem:[#allocation2 + $0x10] sm:$0xff] %vm761, %v742
      %765 = vst.msk [vmem:[#allocation2 + $0x18] sm:$0xff] %vm761, %v744
      %766 = vst.msk [vmem:[#allocation2 + $0x20] sm:$0xff] %vm761, %v746
      %767 = vst.msk [vmem:[#allocation2 + $0x28] sm:$0xff] %vm761, %v748
      %768 = vst.msk [vmem:[#allocation2 + $0x30] sm:$0xff] %vm761, %v750
      %769 = vst.msk [vmem:[#allocation2 + $0x38] sm:$0xff] %vm761, %v752
      %771 = vrot.lane.b32.xlu0 %v362, 32
      %v772 = vpop.permute.xlu0 %771
      %773 = vrot.lane.b32.xlu0 %v363, 32
      %v774 = vpop.permute.xlu0 %773
      %775 = vrot.lane.b32.xlu0 %v364, 32
      %v776 = vpop.permute.xlu0 %775
      %777 = vrot.lane.b32.xlu0 %v365, 32
      %v778 = vpop.permute.xlu0 %777
      %779 = vrot.lane.b32.xlu0 %v366, 32
      %v780 = vpop.permute.xlu0 %779
      %781 = vrot.lane.b32.xlu0 %v367, 32
      %v782 = vpop.permute.xlu0 %781
      %783 = vrot.lane.b32.xlu0 %v368, 32
      %v784 = vpop.permute.xlu0 %783
      %785 = vrot.lane.b32.xlu0 %v369, 32
      %v786 = vpop.permute.xlu0 %785
      %787 = vrot.lane.b32.xlu0 %v370, 32
      %v788 = vpop.permute.xlu0 %787
      %789 = vrot.lane.b32.xlu0 %v371, 32
      %v790 = vpop.permute.xlu0 %789
      %791 = vrot.lane.b32.xlu0 %v372, 32
      %v792 = vpop.permute.xlu0 %791
      %793 = vrot.lane.b32.xlu0 %v373, 32
      %v794 = vpop.permute.xlu0 %793
      %795 = vrot.lane.b32.xlu0 %v374, 32
      %v796 = vpop.permute.xlu0 %795
      %797 = vrot.lane.b32.xlu0 %v375, 32
      %v798 = vpop.permute.xlu0 %797
      %799 = vrot.lane.b32.xlu0 %v376, 32
      %v800 = vpop.permute.xlu0 %799
      %801 = vrot.lane.b32.xlu0 %v377, 32
      %v802 = vpop.permute.xlu0 %801
      %vm819 = vcmask 294145
      %820 = vst.msk [vmem:[#allocation2 - $0x1] sm:$0xfe] %vm819, %v772
      %vm821 = vcmask 286976
      %822 = vst.msk [vmem:[#allocation2 + $0x7] sm:$0x1] %vm821, %v774
      %823 = vst.msk [vmem:[#allocation2 + $0x7] sm:$0xfe] %vm819, %v776
      %824 = vst.msk [vmem:[#allocation2 + $0xf] sm:$0x1] %vm821, %v778
      %825 = vst.msk [vmem:[#allocation2 + $0xf] sm:$0xfe] %vm819, %v780
      %826 = vst.msk [vmem:[#allocation2 + $0x17] sm:$0x1] %vm821, %v782
      %827 = vst.msk [vmem:[#allocation2 + $0x17] sm:$0xfe] %vm819, %v784
      %828 = vst.msk [vmem:[#allocation2 + $0x1f] sm:$0x1] %vm821, %v786
      %829 = vst.msk [vmem:[#allocation2 + $0x1f] sm:$0xfe] %vm819, %v788
      %830 = vst.msk [vmem:[#allocation2 + $0x27] sm:$0x1] %vm821, %v790
      %831 = vst.msk [vmem:[#allocation2 + $0x27] sm:$0xfe] %vm819, %v792
      %832 = vst.msk [vmem:[#allocation2 + $0x2f] sm:$0x1] %vm821, %v794
      %833 = vst.msk [vmem:[#allocation2 + $0x2f] sm:$0xfe] %vm819, %v796
      %834 = vst.msk [vmem:[#allocation2 + $0x37] sm:$0x1] %vm821, %v798
      %835 = vst.msk [vmem:[#allocation2 + $0x37] sm:$0xfe] %vm819, %v800
      %836 = vst.msk [vmem:[#allocation2 + $0x3f] sm:$0x1] %vm821, %v802
      %v837 = vld [vmem:[#allocation2] sm:$0xff]
      %v838 = vld [vmem:[#allocation2 + $0x8] sm:$0xff]
      %v839 = vld [vmem:[#allocation2 + $0x10] sm:$0xff]
      %v840 = vld [vmem:[#allocation2 + $0x18] sm:$0xff]
      %v841 = vld [vmem:[#allocation2 + $0x20] sm:$0xff]
      %v842 = vld [vmem:[#allocation2 + $0x28] sm:$0xff]
      %v843 = vld [vmem:[#allocation2 + $0x30] sm:$0xff]
      %v844 = vld [vmem:[#allocation2 + $0x38] sm:$0xff]
      %v845 = vld [vmem:[%s1] sm:$0xff]
      %v846 = vld [vmem:[%s1 + $0x8] sm:$0xff]
      %v847 = vld [vmem:[%s1 + $0x10] sm:$0xff]
      %v848 = vld [vmem:[%s1 + $0x18] sm:$0xff]
      %v849 = vld [vmem:[%s1 + $0x20] sm:$0xf]
      %vm850 = vcmask 293888
      %v852 = vsel %vm850, %v837, 0
      %v855 = vsel %vm850, %v838, 0
      %v858 = vsel %vm850, %v839, 0
      %v861 = vsel %vm850, %v840, 0
      %v864 = vsel %vm850, %v841, 0
      %v867 = vsel %vm850, %v842, 0
      %v870 = vsel %vm850, %v843, 0
      %v873 = vsel %vm850, %v844, 0
      %vm875 = vcmask 1043456
      %v877 = vsel %vm875, %v849, 0
      %879 = vmatprep.subr.mxu0 0.0
      %880 = vmatpush1.msra.mxu0 %v845
      %881 = vmatprep.subr.mxu0 0.0
      %882 = vmatpush1.msra.mxu0 %v846
      %883 = vmatprep.subr.mxu0 0.0
      %884 = vmatpush1.msra.mxu0 %v847
      %885 = vmatprep.subr.mxu0 0.0
      %886 = vmatpush1.msra.mxu0 %v848
      %887 = vmatprep.subr.mxu0 0.0
      %888 = vmatpush1.msra.mxu0 %v877
      %889 = vmatprep.subr.mxu0 0.0
      %890 = vmatpush1.msra.mxu0 0.0
      %891 = vmatprep.subr.mxu0 0.0
      %892 = vmatpush1.msra.mxu0 0.0
      %893 = vmatprep.subr.mxu0 0.0
      %894 = vmatpush1.msra.mxu0 0.0
      %895 = vmatprep.subr.mxu0 0.0
      %896 = vmatpush1.msra.mxu0 0.0
      %897 = vmatprep.subr.mxu0 0.0
      %898 = vmatpush1.msra.mxu0 0.0
      %899 = vmatprep.subr.mxu0 0.0
      %900 = vmatpush1.msra.mxu0 0.0
      %901 = vmatprep.subr.mxu0 0.0
      %902 = vmatpush1.msra.mxu0 0.0
      %903 = vmatprep.subr.mxu0 0.0
      %904 = vmatpush1.msra.mxu0 0.0
      %905 = vmatprep.subr.mxu0 0.0
      %906 = vmatpush1.msra.mxu0 0.0
      %907 = vmatprep.subr.mxu0 0.0
      %908 = vmatpush1.msra.mxu0 0.0
      %909 = vmatprep.subr.mxu0 0.0
      %910 = vmatpush1.msra.mxu0 0.0
      %911 = vmatprep.subr.mxu0 0.0
      %912 = vmatpush1.msra.mxu0 0.0
      %913 = vmatprep.subr.mxu0 0.0
      %914 = vmatpush1.msra.mxu0 0.0
      %915 = vmatprep.subr.mxu0 0.0
      %916 = vmatpush1.msra.mxu0 0.0
      %917 = vmatprep.subr.mxu0 0.0
      %918 = vmatpush1.msra.mxu0 0.0
      %919 = vmatprep.subr.mxu0 0.0
      %920 = vmatpush1.msra.mxu0 0.0
      %921 = vmatprep.subr.mxu0 0.0
      %922 = vmatpush1.msra.mxu0 0.0
      %923 = vmatprep.subr.mxu0 0.0
      %924 = vmatpush1.msra.mxu0 0.0
      %925 = vmatprep.subr.mxu0 0.0
      %926 = vmatpush1.msra.mxu0 0.0
      %927 = vmatprep.subr.mxu0 0.0
      %928 = vmatpush1.msra.mxu0 0.0
      %929 = vmatprep.subr.mxu0 0.0
      %930 = vmatpush1.msra.mxu0 0.0
      %931 = vmatprep.subr.mxu0 0.0
      %932 = vmatpush1.msra.mxu0 0.0
      %933 = vmatprep.subr.mxu0 0.0
      %934 = vmatpush1.msra.mxu0 0.0
      %935 = vmatprep.subr.mxu0 0.0
      %936 = vmatpush1.msra.mxu0 0.0
      %937 = vmatprep.subr.mxu0 0.0
      %938 = vmatpush1.msra.mxu0 0.0
      %939 = vmatprep.subr.mxu0 0.0
      %940 = vmatpush1.msra.mxu0 0.0
      %941 = vmatprep.subr.mxu0 0.0
      %942 = vmatpush1.msra.mxu0 0.0
      %943 = vmatprep.mubr.f32.mxu0 0.0
      %944 = vmatmul.mubr.f32.gmra.mrb[0].mxu0 %v852
      %v945 = vpop.f32.mrb[0].mxu0
      %v946 = vadd.f32 0.0, %v945
      %v947 = vpop.f32.mrb[0].mxu0
      %948 = vmatprep.mubr.f32.mxu0 0.0
      %949 = vmatmul.mubr.f32.gmra.mrb[0].mxu0 %v855
      %v950 = vpop.f32.mrb[0].mxu0
      %v951 = vadd.f32 0.0, %v950
      %v952 = vpop.f32.mrb[0].mxu0
      %953 = vmatprep.mubr.f32.mxu0 0.0
      %954 = vmatmul.mubr.f32.gmra.mrb[0].mxu0 %v858
      %v955 = vpop.f32.mrb[0].mxu0
      %v956 = vadd.f32 0.0, %v955
      %v957 = vpop.f32.mrb[0].mxu0
      %958 = vmatprep.mubr.f32.mxu0 0.0
      %959 = vmatmul.mubr.f32.gmra.mrb[0].mxu0 %v861
      %v960 = vpop.f32.mrb[0].mxu0
      %v961 = vadd.f32 0.0, %v960
      %v962 = vpop.f32.mrb[0].mxu0
      %963 = vmatprep.mubr.f32.mxu0 0.0
      %964 = vmatmul.mubr.f32.gmra.mrb[0].mxu0 %v864
      %v965 = vpop.f32.mrb[0].mxu0
      %v966 = vadd.f32 0.0, %v965
      %v967 = vpop.f32.mrb[0].mxu0
      %968 = vmatprep.mubr.f32.mxu0 0.0
      %969 = vmatmul.mubr.f32.gmra.mrb[0].mxu0 %v867
      %v970 = vpop.f32.mrb[0].mxu0
      %v971 = vadd.f32 0.0, %v970
      %v972 = vpop.f32.mrb[0].mxu0
      %973 = vmatprep.mubr.f32.mxu0 0.0
      %974 = vmatmul.mubr.f32.gmra.mrb[0].mxu0 %v870
      %v975 = vpop.f32.mrb[0].mxu0
      %v976 = vadd.f32 0.0, %v975
      %v977 = vpop.f32.mrb[0].mxu0
      %978 = vmatprep.mubr.f32.mxu0 0.0
      %979 = vmatmul.mubr.f32.gmra.mrb[0].mxu0 %v873
      %v980 = vpop.f32.mrb[0].mxu0
      %v981 = vadd.f32 0.0, %v980
      %v982 = vpop.f32.mrb[0].mxu0
      %983 = vdwg.mxu0
      %v984 = vld [vmem:[%s3] sm:$0x1]
      %v986 = vlaneseq
      %v987 = vshrl.u32 %v986, 7
      %v988 = vsub.s32 0, %v987
      %v989 = vrot.slane %v984, %v988
      %v991 = vmul.f32 %v946, %v989
      %v992 = vmul.f32 %v951, %v989
      %v993 = vmul.f32 %v956, %v989
      %v994 = vmul.f32 %v961, %v989
      %v995 = vmul.f32 %v966, %v989
      %v996 = vmul.f32 %v971, %v989
      %v997 = vmul.f32 %v976, %v989
      %v998 = vmul.f32 %v981, %v989
      %v999 = vld [vmem:[%s4] sm:$0x1]
      %v1001 = vlaneseq
      %v1002 = vshrl.u32 %v1001, 7
      %v1003 = vsub.s32 0, %v1002
      %v1004 = vrot.slane %v999, %v1003
      %v1006 = vadd.f32 %v991, %v1004
      %v1007 = vadd.f32 %v992, %v1004
      %v1008 = vadd.f32 %v993, %v1004
      %v1009 = vadd.f32 %v994, %v1004
      %v1010 = vadd.f32 %v995, %v1004
      %v1011 = vadd.f32 %v996, %v1004
      %v1012 = vadd.f32 %v997, %v1004
      %v1013 = vadd.f32 %v998, %v1004
      %vm1014 = vcmask 64512
      %1015 = vst.msk [vmem:[#allocation3] sm:$0xff] %vm1014, 0.0
      %vm1016 = vcmask 57344
      %1017 = vst.msk [vmem:[#allocation3] sm:$0x1] %vm1016, 0.0
      %1018 = vst.msk [vmem:[#allocation3 + $0x8] sm:$0x1] %vm1016, 0.0
      %1019 = vst.msk [vmem:[#allocation3 + $0x10] sm:$0x1] %vm1016, 0.0
      %1020 = vst.msk [vmem:[#allocation3 + $0x18] sm:$0x1] %vm1016, 0.0
      %1021 = vst.msk [vmem:[#allocation3 + $0x20] sm:$0x1] %vm1016, 0.0
      %1022 = vst.msk [vmem:[#allocation3 + $0x28] sm:$0x1] %vm1016, 0.0
      %1023 = vst.msk [vmem:[#allocation3 + $0x30] sm:$0x1] %vm1016, 0.0
      %1024 = vst.msk [vmem:[#allocation3 + $0x38] sm:$0x1] %vm1016, 0.0
      %s1025 = scalar_lea.vmem [#allocation3], 8
      %vm1026 = vcmask 63488
      %1027 = vst.msk [vmem:[%s1025 + $0x1] sm:$0x7f] %vm1026, %v1006
      %1028 = vst.msk [vmem:[%s1025 + $0x9] sm:$0x7f] %vm1026, %v1007
      %1029 = vst.msk [vmem:[%s1025 + $0x11] sm:$0x7f] %vm1026, %v1008
      %1030 = vst.msk [vmem:[%s1025 + $0x19] sm:$0x7f] %vm1026, %v1009
      %1031 = vst.msk [vmem:[%s1025 + $0x21] sm:$0x7f] %vm1026, %v1010
      %1032 = vst.msk [vmem:[%s1025 + $0x29] sm:$0x7f] %vm1026, %v1011
      %1033 = vst.msk [vmem:[%s1025 + $0x31] sm:$0x7f] %vm1026, %v1012
      %vm1034 = vcmask 130112
      %1035 = vst.msk [vmem:[#allocation3] sm:$0xff] %vm1034, 0.0
      %1043 = vrot.lane.b32.xlu0 %v1006, 8
      %v1044 = vpop.permute.xlu0 %1043
      %1045 = vrot.lane.b32.xlu0 %v1007, 8
      %v1046 = vpop.permute.xlu0 %1045
      %1047 = vrot.lane.b32.xlu0 %v1008, 8
      %v1048 = vpop.permute.xlu0 %1047
      %1049 = vrot.lane.b32.xlu0 %v1009, 8
      %v1050 = vpop.permute.xlu0 %1049
      %1051 = vrot.lane.b32.xlu0 %v1010, 8
      %v1052 = vpop.permute.xlu0 %1051
      %1053 = vrot.lane.b32.xlu0 %v1011, 8
      %v1054 = vpop.permute.xlu0 %1053
      %1055 = vrot.lane.b32.xlu0 %v1012, 8
      %v1056 = vpop.permute.xlu0 %1055
      %1064 = vst.msk [vmem:[%s1025] sm:$0xff] %vm1034, %v1044
      %1065 = vst.msk [vmem:[%s1025 + $0x8] sm:$0xff] %vm1034, %v1046
      %1066 = vst.msk [vmem:[%s1025 + $0x10] sm:$0xff] %vm1034, %v1048
      %1067 = vst.msk [vmem:[%s1025 + $0x18] sm:$0xff] %vm1034, %v1050
      %1068 = vst.msk [vmem:[%s1025 + $0x20] sm:$0xff] %vm1034, %v1052
      %1069 = vst.msk [vmem:[%s1025 + $0x28] sm:$0xff] %vm1034, %v1054
      %1070 = vst.msk [vmem:[%s1025 + $0x30] sm:$0xff] %vm1034, %v1056
      %vm1071 = vcmask 195712
      %1072 = vst.msk [vmem:[#allocation3] sm:$0xff] %vm1071, 0.0
      %vm1073 = vcmask 188544
      %1074 = vst.msk [vmem:[#allocation3 + $0x7] sm:$0x1] %vm1073, 0.0
      %1075 = vst.msk [vmem:[#allocation3 + $0xf] sm:$0x1] %vm1073, 0.0
      %1076 = vst.msk [vmem:[#allocation3 + $0x17] sm:$0x1] %vm1073, 0.0
      %1077 = vst.msk [vmem:[#allocation3 + $0x1f] sm:$0x1] %vm1073, 0.0
      %1078 = vst.msk [vmem:[#allocation3 + $0x27] sm:$0x1] %vm1073, 0.0
      %1079 = vst.msk [vmem:[#allocation3 + $0x2f] sm:$0x1] %vm1073, 0.0
      %1080 = vst.msk [vmem:[#allocation3 + $0x37] sm:$0x1] %vm1073, 0.0
      %1081 = vst.msk [vmem:[#allocation3 + $0x3f] sm:$0x1] %vm1073, 0.0
      %1082 = vrot.lane.b32.xlu0 %v1006, 16
      %v1083 = vpop.permute.xlu0 %1082
      %1084 = vrot.lane.b32.xlu0 %v1007, 16
      %v1085 = vpop.permute.xlu0 %1084
      %1086 = vrot.lane.b32.xlu0 %v1008, 16
      %v1087 = vpop.permute.xlu0 %1086
      %1088 = vrot.lane.b32.xlu0 %v1009, 16
      %v1089 = vpop.permute.xlu0 %1088
      %1090 = vrot.lane.b32.xlu0 %v1010, 16
      %v1091 = vpop.permute.xlu0 %1090
      %1092 = vrot.lane.b32.xlu0 %v1011, 16
      %v1093 = vpop.permute.xlu0 %1092
      %1094 = vrot.lane.b32.xlu0 %v1012, 16
      %v1095 = vpop.permute.xlu0 %1094
      %vm1103 = vcmask 195713
      %1104 = vst.msk [vmem:[%s1025 - $0x1] sm:$0xfe] %vm1103, %v1083
      %1105 = vst.msk [vmem:[%s1025 + $0x7] sm:$0xfe] %vm1103, %v1085
      %1106 = vst.msk [vmem:[%s1025 + $0xf] sm:$0xfe] %vm1103, %v1087
      %1107 = vst.msk [vmem:[%s1025 + $0x17] sm:$0xfe] %vm1103, %v1089
      %1108 = vst.msk [vmem:[%s1025 + $0x1f] sm:$0xfe] %vm1103, %v1091
      %1109 = vst.msk [vmem:[%s1025 + $0x27] sm:$0xfe] %vm1103, %v1093
      %1110 = vst.msk [vmem:[%s1025 + $0x2f] sm:$0xfe] %vm1103, %v1095
      %vm1111 = vcmask 254144
      %1112 = vst.msk [vmem:[#allocation3] sm:$0x1] %vm1111, 0.0
      %1113 = vst.msk [vmem:[#allocation3 + $0x8] sm:$0x1] %vm1111, 0.0
      %1114 = vst.msk [vmem:[#allocation3 + $0x10] sm:$0x1] %vm1111, 0.0
      %1115 = vst.msk [vmem:[#allocation3 + $0x18] sm:$0x1] %vm1111, 0.0
      %1116 = vst.msk [vmem:[#allocation3 + $0x20] sm:$0x1] %vm1111, 0.0
      %1117 = vst.msk [vmem:[#allocation3 + $0x28] sm:$0x1] %vm1111, 0.0
      %1118 = vst.msk [vmem:[#allocation3 + $0x30] sm:$0x1] %vm1111, 0.0
      %1119 = vst.msk [vmem:[#allocation3 + $0x38] sm:$0x1] %vm1111, 0.0
      %1121 = vrot.lane.b32.xlu0 %v1006, 24
      %v1122 = vpop.permute.xlu0 %1121
      %1123 = vrot.lane.b32.xlu0 %v1007, 24
      %v1124 = vpop.permute.xlu0 %1123
      %1125 = vrot.lane.b32.xlu0 %v1008, 24
      %v1126 = vpop.permute.xlu0 %1125
      %1127 = vrot.lane.b32.xlu0 %v1009, 24
      %v1128 = vpop.permute.xlu0 %1127
      %1129 = vrot.lane.b32.xlu0 %v1010, 24
      %v1130 = vpop.permute.xlu0 %1129
      %1131 = vrot.lane.b32.xlu0 %v1011, 24
      %v1132 = vpop.permute.xlu0 %1131
      %1133 = vrot.lane.b32.xlu0 %v1012, 24
      %v1134 = vpop.permute.xlu0 %1133
      %1135 = vrot.lane.b32.xlu0 %v1013, 24
      %v1136 = vpop.permute.xlu0 %1135
      %vm1145 = vcmask 260288
      %1146 = vst.msk [vmem:[#allocation3 + $0x1] sm:$0x7f] %vm1145, %v1122
      %1147 = vst.msk [vmem:[#allocation3 + $0x9] sm:$0x7f] %vm1145, %v1124
      %1148 = vst.msk [vmem:[#allocation3 + $0x11] sm:$0x7f] %vm1145, %v1126
      %1149 = vst.msk [vmem:[#allocation3 + $0x19] sm:$0x7f] %vm1145, %v1128
      %1150 = vst.msk [vmem:[#allocation3 + $0x21] sm:$0x7f] %vm1145, %v1130
      %1151 = vst.msk [vmem:[#allocation3 + $0x29] sm:$0x7f] %vm1145, %v1132
      %1152 = vst.msk [vmem:[#allocation3 + $0x31] sm:$0x7f] %vm1145, %v1134
      %1153 = vst.msk [vmem:[#allocation3 + $0x39] sm:$0x7f] %vm1145, %v1136
      %1154 = vrot.lane.b32.xlu0 %v1006, 32
      %v1155 = vpop.permute.xlu0 %1154
      %1156 = vrot.lane.b32.xlu0 %v1007, 32
      %v1157 = vpop.permute.xlu0 %1156
      %1158 = vrot.lane.b32.xlu0 %v1008, 32
      %v1159 = vpop.permute.xlu0 %1158
      %1160 = vrot.lane.b32.xlu0 %v1009, 32
      %v1161 = vpop.permute.xlu0 %1160
      %1162 = vrot.lane.b32.xlu0 %v1010, 32
      %v1163 = vpop.permute.xlu0 %1162
      %1164 = vrot.lane.b32.xlu0 %v1011, 32
      %v1165 = vpop.permute.xlu0 %1164
      %1166 = vrot.lane.b32.xlu0 %v1012, 32
      %v1167 = vpop.permute.xlu0 %1166
      %1168 = vrot.lane.b32.xlu0 %v1013, 32
      %v1169 = vpop.permute.xlu0 %1168
      %vm1178 = vcmask 326912
      %1179 = vst.msk [vmem:[#allocation3] sm:$0xff] %vm1178, %v1155
      %1180 = vst.msk [vmem:[#allocation3 + $0x8] sm:$0xff] %vm1178, %v1157
      %1181 = vst.msk [vmem:[#allocation3 + $0x10] sm:$0xff] %vm1178, %v1159
      %1182 = vst.msk [vmem:[#allocation3 + $0x18] sm:$0xff] %vm1178, %v1161
      %1183 = vst.msk [vmem:[#allocation3 + $0x20] sm:$0xff] %vm1178, %v1163
      %1184 = vst.msk [vmem:[#allocation3 + $0x28] sm:$0xff] %vm1178, %v1165
      %1185 = vst.msk [vmem:[#allocation3 + $0x30] sm:$0xff] %vm1178, %v1167
      %1186 = vst.msk [vmem:[#allocation3 + $0x38] sm:$0xff] %vm1178, %v1169
      %vm1187 = vcmask 385344
      %1188 = vst.msk [vmem:[#allocation3 + $0x7] sm:$0x1] %vm1187, 0.0
      %1189 = vst.msk [vmem:[#allocation3 + $0xf] sm:$0x1] %vm1187, 0.0
      %1190 = vst.msk [vmem:[#allocation3 + $0x17] sm:$0x1] %vm1187, 0.0
      %1191 = vst.msk [vmem:[#allocation3 + $0x1f] sm:$0x1] %vm1187, 0.0
      %1192 = vst.msk [vmem:[#allocation3 + $0x27] sm:$0x1] %vm1187, 0.0
      %1193 = vst.msk [vmem:[#allocation3 + $0x2f] sm:$0x1] %vm1187, 0.0
      %1194 = vst.msk [vmem:[#allocation3 + $0x37] sm:$0x1] %vm1187, 0.0
      %1195 = vst.msk [vmem:[#allocation3 + $0x3f] sm:$0x1] %vm1187, 0.0
      %1196 = vrot.lane.b32.xlu0 %v1006, 40
      %v1197 = vpop.permute.xlu0 %1196
      %1198 = vrot.lane.b32.xlu0 %v1007, 40
      %v1199 = vpop.permute.xlu0 %1198
      %1200 = vrot.lane.b32.xlu0 %v1008, 40
      %v1201 = vpop.permute.xlu0 %1200
      %1202 = vrot.lane.b32.xlu0 %v1009, 40
      %v1203 = vpop.permute.xlu0 %1202
      %1204 = vrot.lane.b32.xlu0 %v1010, 40
      %v1205 = vpop.permute.xlu0 %1204
      %1206 = vrot.lane.b32.xlu0 %v1011, 40
      %v1207 = vpop.permute.xlu0 %1206
      %1208 = vrot.lane.b32.xlu0 %v1012, 40
      %v1209 = vpop.permute.xlu0 %1208
      %1210 = vrot.lane.b32.xlu0 %v1013, 40
      %v1211 = vpop.permute.xlu0 %1210
      %vm1220 = vcmask 392513
      %1221 = vst.msk [vmem:[#allocation3 - $0x1] sm:$0xfe] %vm1220, %v1197
      %1222 = vst.msk [vmem:[#allocation3 + $0x7] sm:$0xfe] %vm1220, %v1199
      %1223 = vst.msk [vmem:[#allocation3 + $0xf] sm:$0xfe] %vm1220, %v1201
      %1224 = vst.msk [vmem:[#allocation3 + $0x17] sm:$0xfe] %vm1220, %v1203
      %1225 = vst.msk [vmem:[#allocation3 + $0x1f] sm:$0xfe] %vm1220, %v1205
      %1226 = vst.msk [vmem:[#allocation3 + $0x27] sm:$0xfe] %vm1220, %v1207
      %1227 = vst.msk [vmem:[#allocation3 + $0x2f] sm:$0xfe] %vm1220, %v1209
      %1228 = vst.msk [vmem:[#allocation3 + $0x37] sm:$0xfe] %vm1220, %v1211
      %s1229 = scalar_lea.vmem [#allocation3], 56
      %vm1230 = vcmask 458112
      %1231 = vst.msk [vmem:[%s1229] sm:$0xff] %vm1230, 0.0
      %vm1232 = vcmask 450944
      %1233 = vst.msk [vmem:[#allocation3] sm:$0x1] %vm1232, 0.0
      %1234 = vst.msk [vmem:[#allocation3 + $0x8] sm:$0x1] %vm1232, 0.0
      %1235 = vst.msk [vmem:[#allocation3 + $0x10] sm:$0x1] %vm1232, 0.0
      %1236 = vst.msk [vmem:[#allocation3 + $0x18] sm:$0x1] %vm1232, 0.0
      %1237 = vst.msk [vmem:[#allocation3 + $0x20] sm:$0x1] %vm1232, 0.0
      %1238 = vst.msk [vmem:[#allocation3 + $0x28] sm:$0x1] %vm1232, 0.0
      %1239 = vst.msk [vmem:[#allocation3 + $0x30] sm:$0x1] %vm1232, 0.0
      %1240 = vst.msk [vmem:[#allocation3 + $0x38] sm:$0x1] %vm1232, 0.0
      %1241 = vrot.lane.b32.xlu0 %v1007, 48
      %v1242 = vpop.permute.xlu0 %1241
      %1243 = vrot.lane.b32.xlu0 %v1008, 48
      %v1244 = vpop.permute.xlu0 %1243
      %1245 = vrot.lane.b32.xlu0 %v1009, 48
      %v1246 = vpop.permute.xlu0 %1245
      %1247 = vrot.lane.b32.xlu0 %v1010, 48
      %v1248 = vpop.permute.xlu0 %1247
      %1249 = vrot.lane.b32.xlu0 %v1011, 48
      %v1250 = vpop.permute.xlu0 %1249
      %1251 = vrot.lane.b32.xlu0 %v1012, 48
      %v1252 = vpop.permute.xlu0 %1251
      %1253 = vrot.lane.b32.xlu0 %v1013, 48
      %v1254 = vpop.permute.xlu0 %1253
      %vm1262 = vcmask 457088
      %1263 = vst.msk [vmem:[#allocation3 + $0x1] sm:$0x7f] %vm1262, %v1242
      %1264 = vst.msk [vmem:[#allocation3 + $0x9] sm:$0x7f] %vm1262, %v1244
      %1265 = vst.msk [vmem:[#allocation3 + $0x11] sm:$0x7f] %vm1262, %v1246
      %1266 = vst.msk [vmem:[#allocation3 + $0x19] sm:$0x7f] %vm1262, %v1248
      %1267 = vst.msk [vmem:[#allocation3 + $0x21] sm:$0x7f] %vm1262, %v1250
      %1268 = vst.msk [vmem:[#allocation3 + $0x29] sm:$0x7f] %vm1262, %v1252
      %1269 = vst.msk [vmem:[#allocation3 + $0x31] sm:$0x7f] %vm1262, %v1254
      %vm1270 = vcmask 523712
      %1271 = vst.msk [vmem:[%s1229] sm:$0xff] %vm1270, 0.0
      %1272 = vrot.lane.b32.xlu0 %v1007, 56
      %v1273 = vpop.permute.xlu0 %1272
      %1274 = vrot.lane.b32.xlu0 %v1008, 56
      %v1275 = vpop.permute.xlu0 %1274
      %1276 = vrot.lane.b32.xlu0 %v1009, 56
      %v1277 = vpop.permute.xlu0 %1276
      %1278 = vrot.lane.b32.xlu0 %v1010, 56
      %v1279 = vpop.permute.xlu0 %1278
      %1280 = vrot.lane.b32.xlu0 %v1011, 56
      %v1281 = vpop.permute.xlu0 %1280
      %1282 = vrot.lane.b32.xlu0 %v1012, 56
      %v1283 = vpop.permute.xlu0 %1282
      %1284 = vrot.lane.b32.xlu0 %v1013, 56
      %v1285 = vpop.permute.xlu0 %1284
      %1293 = vst.msk [vmem:[#allocation3] sm:$0xff] %vm1270, %v1273
      %1294 = vst.msk [vmem:[#allocation3 + $0x8] sm:$0xff] %vm1270, %v1275
      %1295 = vst.msk [vmem:[#allocation3 + $0x10] sm:$0xff] %vm1270, %v1277
      %1296 = vst.msk [vmem:[#allocation3 + $0x18] sm:$0xff] %vm1270, %v1279
      %1297 = vst.msk [vmem:[#allocation3 + $0x20] sm:$0xff] %vm1270, %v1281
      %1298 = vst.msk [vmem:[#allocation3 + $0x28] sm:$0xff] %vm1270, %v1283
      %1299 = vst.msk [vmem:[#allocation3 + $0x30] sm:$0xff] %vm1270, %v1285
      %vm1300 = vcmask 589312
      %1301 = vst.msk [vmem:[%s1229] sm:$0xff] %vm1300, 0.0
      %vm1302 = vcmask 582144
      %1303 = vst.msk [vmem:[#allocation3 + $0x7] sm:$0x1] %vm1302, 0.0
      %1304 = vst.msk [vmem:[#allocation3 + $0xf] sm:$0x1] %vm1302, 0.0
      %1305 = vst.msk [vmem:[#allocation3 + $0x17] sm:$0x1] %vm1302, 0.0
      %1306 = vst.msk [vmem:[#allocation3 + $0x1f] sm:$0x1] %vm1302, 0.0
      %1307 = vst.msk [vmem:[#allocation3 + $0x27] sm:$0x1] %vm1302, 0.0
      %1308 = vst.msk [vmem:[#allocation3 + $0x2f] sm:$0x1] %vm1302, 0.0
      %1309 = vst.msk [vmem:[#allocation3 + $0x37] sm:$0x1] %vm1302, 0.0
      %1310 = vst.msk [vmem:[#allocation3 + $0x3f] sm:$0x1] %vm1302, 0.0
      %1311 = vrot.lane.b32.xlu0 %v1007, 64
      %v1312 = vpop.permute.xlu0 %1311
      %1313 = vrot.lane.b32.xlu0 %v1008, 64
      %v1314 = vpop.permute.xlu0 %1313
      %1315 = vrot.lane.b32.xlu0 %v1009, 64
      %v1316 = vpop.permute.xlu0 %1315
      %1317 = vrot.lane.b32.xlu0 %v1010, 64
      %v1318 = vpop.permute.xlu0 %1317
      %1319 = vrot.lane.b32.xlu0 %v1011, 64
      %v1320 = vpop.permute.xlu0 %1319
      %1321 = vrot.lane.b32.xlu0 %v1012, 64
      %v1322 = vpop.permute.xlu0 %1321
      %1323 = vrot.lane.b32.xlu0 %v1013, 64
      %v1324 = vpop.permute.xlu0 %1323
      %vm1332 = vcmask 589313
      %1333 = vst.msk [vmem:[#allocation3 - $0x1] sm:$0xfe] %vm1332, %v1312
      %1334 = vst.msk [vmem:[#allocation3 + $0x7] sm:$0xfe] %vm1332, %v1314
      %1335 = vst.msk [vmem:[#allocation3 + $0xf] sm:$0xfe] %vm1332, %v1316
      %1336 = vst.msk [vmem:[#allocation3 + $0x17] sm:$0xfe] %vm1332, %v1318
      %1337 = vst.msk [vmem:[#allocation3 + $0x1f] sm:$0xfe] %vm1332, %v1320
      %1338 = vst.msk [vmem:[#allocation3 + $0x27] sm:$0xfe] %vm1332, %v1322
      %1339 = vst.msk [vmem:[#allocation3 + $0x2f] sm:$0xfe] %vm1332, %v1324
      %v1340 = vld [vmem:[#allocation3] sm:$0xff]
      %v1341 = vld [vmem:[#allocation3 + $0x8] sm:$0xff]
      %v1342 = vld [vmem:[#allocation3 + $0x10] sm:$0xff]
      %v1343 = vld [vmem:[#allocation3 + $0x18] sm:$0xff]
      %v1344 = vld [vmem:[#allocation3 + $0x20] sm:$0xff]
      %v1345 = vld [vmem:[#allocation3 + $0x28] sm:$0xff]
      %v1346 = vld [vmem:[#allocation3 + $0x30] sm:$0xff]
      %v1347 = vld [vmem:[#allocation3 + $0x38] sm:$0xff]
      %v1348 = vld [vmem:[%s2] sm:$0xff]
      %v1349 = vld [vmem:[%s2 + $0x8] sm:$0xff]
      %v1350 = vld [vmem:[%s2 + $0x10] sm:$0xff]
      %v1351 = vld [vmem:[%s2 + $0x18] sm:$0xff]
      %v1352 = vld [vmem:[%s2 + $0x20] sm:$0xff]
      %v1353 = vld [vmem:[%s2 + $0x28] sm:$0xff]
      %v1354 = vld [vmem:[%s2 + $0x30] sm:$0xff]
      %v1355 = vld [vmem:[%s2 + $0x38] sm:$0xff]
      %v1356 = vld [vmem:[%s2 + $0x40] sm:$0xff]
      %vm1357 = vcmask 588800
      %v1359 = vsel %vm1357, %v1340, 0
      %v1362 = vsel %vm1357, %v1341, 0
      %v1365 = vsel %vm1357, %v1342, 0
      %v1368 = vsel %vm1357, %v1343, 0
      %v1371 = vsel %vm1357, %v1344, 0
      %v1374 = vsel %vm1357, %v1345, 0
      %v1377 = vsel %vm1357, %v1346, 0
      %v1380 = vsel %vm1357, %v1347, 0
      %1382 = vmatprep.subr.mxu0 0.0
      %1383 = vmatpush1.msra.mxu0 %v1348
      %1384 = vmatprep.subr.mxu0 0.0
      %1385 = vmatpush1.msra.mxu0 %v1349
      %1386 = vmatprep.subr.mxu0 0.0
      %1387 = vmatpush1.msra.mxu0 %v1350
      %1388 = vmatprep.subr.mxu0 0.0
      %1389 = vmatpush1.msra.mxu0 %v1351
      %1390 = vmatprep.subr.mxu0 0.0
      %1391 = vmatpush1.msra.mxu0 %v1352
      %1392 = vmatprep.subr.mxu0 0.0
      %1393 = vmatpush1.msra.mxu0 %v1353
      %1394 = vmatprep.subr.mxu0 0.0
      %1395 = vmatpush1.msra.mxu0 %v1354
      %1396 = vmatprep.subr.mxu0 0.0
      %1397 = vmatpush1.msra.mxu0 %v1355
      %1398 = vmatprep.subr.mxu0 0.0
      %1399 = vmatpush1.msra.mxu0 %v1356
      %1400 = vmatprep.subr.mxu0 0.0
      %1401 = vmatpush1.msra.mxu0 0.0
      %1402 = vmatprep.subr.mxu0 0.0
      %1403 = vmatpush1.msra.mxu0 0.0
      %1404 = vmatprep.subr.mxu0 0.0
      %1405 = vmatpush1.msra.mxu0 0.0
      %1406 = vmatprep.subr.mxu0 0.0
      %1407 = vmatpush1.msra.mxu0 0.0
      %1408 = vmatprep.subr.mxu0 0.0
      %1409 = vmatpush1.msra.mxu0 0.0
      %1410 = vmatprep.subr.mxu0 0.0
      %1411 = vmatpush1.msra.mxu0 0.0
      %1412 = vmatprep.subr.mxu0 0.0
      %1413 = vmatpush1.msra.mxu0 0.0
      %1414 = vmatprep.subr.mxu0 0.0
      %1415 = vmatpush1.msra.mxu0 0.0
      %1416 = vmatprep.subr.mxu0 0.0
      %1417 = vmatpush1.msra.mxu0 0.0
      %1418 = vmatprep.subr.mxu0 0.0
      %1419 = vmatpush1.msra.mxu0 0.0
      %1420 = vmatprep.subr.mxu0 0.0
      %1421 = vmatpush1.msra.mxu0 0.0
      %1422 = vmatprep.subr.mxu0 0.0
      %1423 = vmatpush1.msra.mxu0 0.0
      %1424 = vmatprep.subr.mxu0 0.0
      %1425 = vmatpush1.msra.mxu0 0.0
      %1426 = vmatprep.subr.mxu0 0.0
      %1427 = vmatpush1.msra.mxu0 0.0
      %1428 = vmatprep.subr.mxu0 0.0
      %1429 = vmatpush1.msra.mxu0 0.0
      %1430 = vmatprep.subr.mxu0 0.0
      %1431 = vmatpush1.msra.mxu0 0.0
      %1432 = vmatprep.subr.mxu0 0.0
      %1433 = vmatpush1.msra.mxu0 0.0
      %1434 = vmatprep.subr.mxu0 0.0
      %1435 = vmatpush1.msra.mxu0 0.0
      %1436 = vmatprep.subr.mxu0 0.0
      %1437 = vmatpush1.msra.mxu0 0.0
      %1438 = vmatprep.subr.mxu0 0.0
      %1439 = vmatpush1.msra.mxu0 0.0
      %1440 = vmatprep.subr.mxu0 0.0
      %1441 = vmatpush1.msra.mxu0 0.0
      %1442 = vmatprep.subr.mxu0 0.0
      %1443 = vmatpush1.msra.mxu0 0.0
      %1444 = vmatprep.subr.mxu0 0.0
      %1445 = vmatpush1.msra.mxu0 0.0
      %1446 = vmatprep.mubr.f32.mxu0 0.0
      %1447 = vmatmul.mubr.f32.gmra.mrb[0].mxu0 %v1359
      %v1448 = vpop.f32.mrb[0].mxu0
      %v1449 = vadd.f32 0.0, %v1448
      %v1450 = vpop.f32.mrb[0].mxu0
      %1451 = vmatprep.mubr.f32.mxu0 0.0
      %1452 = vmatmul.mubr.f32.gmra.mrb[0].mxu0 %v1362
      %v1453 = vpop.f32.mrb[0].mxu0
      %v1454 = vadd.f32 0.0, %v1453
      %v1455 = vpop.f32.mrb[0].mxu0
      %1456 = vmatprep.mubr.f32.mxu0 0.0
      %1457 = vmatmul.mubr.f32.gmra.mrb[0].mxu0 %v1365
      %v1458 = vpop.f32.mrb[0].mxu0
      %v1459 = vadd.f32 0.0, %v1458
      %v1460 = vpop.f32.mrb[0].mxu0
      %1461 = vmatprep.mubr.f32.mxu0 0.0
      %1462 = vmatmul.mubr.f32.gmra.mrb[0].mxu0 %v1368
      %v1463 = vpop.f32.mrb[0].mxu0
      %v1464 = vadd.f32 0.0, %v1463
      %v1465 = vpop.f32.mrb[0].mxu0
      %1466 = vmatprep.mubr.f32.mxu0 0.0
      %1467 = vmatmul.mubr.f32.gmra.mrb[0].mxu0 %v1371
      %v1468 = vpop.f32.mrb[0].mxu0
      %v1469 = vadd.f32 0.0, %v1468
      %v1470 = vpop.f32.mrb[0].mxu0
      %1471 = vmatprep.mubr.f32.mxu0 0.0
      %1472 = vmatmul.mubr.f32.gmra.mrb[0].mxu0 %v1374
      %v1473 = vpop.f32.mrb[0].mxu0
      %v1474 = vadd.f32 0.0, %v1473
      %v1475 = vpop.f32.mrb[0].mxu0
      %1476 = vmatprep.mubr.f32.mxu0 0.0
      %1477 = vmatmul.mubr.f32.gmra.mrb[0].mxu0 %v1377
      %v1478 = vpop.f32.mrb[0].mxu0
      %v1479 = vadd.f32 0.0, %v1478
      %v1480 = vpop.f32.mrb[0].mxu0
      %1481 = vmatprep.mubr.f32.mxu0 0.0
      %1482 = vmatmul.mubr.f32.gmra.mrb[0].mxu0 %v1380
      %v1483 = vpop.f32.mrb[0].mxu0
      %v1484 = vadd.f32 0.0, %v1483
      %v1485 = vpop.f32.mrb[0].mxu0
      %1486 = vdwg.mxu0
      %v1487 = vld [vmem:[%s5] sm:$0x1]
      %v1489 = vlaneseq
      %v1490 = vshrl.u32 %v1489, 7
      %v1491 = vsub.s32 0, %v1490
      %v1492 = vrot.slane %v1487, %v1491
      %v1494 = vmul.f32 %v1449, %v1492
      %v1495 = vmul.f32 %v1454, %v1492
      %v1496 = vmul.f32 %v1459, %v1492
      %v1497 = vmul.f32 %v1464, %v1492
      %v1498 = vmul.f32 %v1469, %v1492
      %v1499 = vmul.f32 %v1474, %v1492
      %v1500 = vmul.f32 %v1479, %v1492
      %v1501 = vmul.f32 %v1484, %v1492
      %v1502 = vld [vmem:[%s6] sm:$0x1]
      %v1504 = vlaneseq
      %v1505 = vshrl.u32 %v1504, 7
      %v1506 = vsub.s32 0, %v1505
      %v1507 = vrot.slane %v1502, %v1506
      %v1509 = vadd.f32 %v1494, %v1507
      %v1510 = vadd.f32 %v1495, %v1507
      %v1511 = vadd.f32 %v1496, %v1507
      %v1512 = vadd.f32 %v1497, %v1507
      %v1513 = vadd.f32 %v1498, %v1507
      %v1514 = vadd.f32 %v1499, %v1507
      %v1515 = vadd.f32 %v1500, %v1507
      %v1516 = vadd.f32 %v1501, %v1507
      %v1517 = vld [vmem:[%s7] sm:$0xf]
      %v1518 = vsel %vm414, %v406, 0
      %v1520 = vsel %vm414, %v407, 0
      %v1522 = vsel %vm414, %v408, 0
      %v1524 = vsel %vm414, %v409, 0
      %v1526 = vsel %vm414, %v410, 0
      %v1528 = vsel %vm414, %v411, 0
      %v1530 = vsel %vm414, %v412, 0
      %v1532 = vsel %vm414, %v413, 0
      %v1535 = vsel %vm875, %v1517, 0
      %1537 = vmatprep.subr.mxu0 0.0
      %1538 = vmatpush1.msra.mxu0 %v1535
      %1539 = vmatprep.subr.mxu0 0.0
      %1540 = vmatpush1.msra.mxu0 0.0
      %1541 = vmatprep.subr.mxu0 0.0
      %1542 = vmatpush1.msra.mxu0 0.0
      %1543 = vmatprep.subr.mxu0 0.0
      %1544 = vmatpush1.msra.mxu0 0.0
      %1545 = vmatprep.subr.mxu0 0.0
      %1546 = vmatpush1.msra.mxu0 0.0
      %1547 = vmatprep.subr.mxu0 0.0
      %1548 = vmatpush1.msra.mxu0 0.0
      %1549 = vmatprep.subr.mxu0 0.0
      %1550 = vmatpush1.msra.mxu0 0.0
      %1551 = vmatprep.subr.mxu0 0.0
      %1552 = vmatpush1.msra.mxu0 0.0
      %1553 = vmatprep.subr.mxu0 0.0
      %1554 = vmatpush1.msra.mxu0 0.0
      %1555 = vmatprep.subr.mxu0 0.0
      %1556 = vmatpush1.msra.mxu0 0.0
      %1557 = vmatprep.subr.mxu0 0.0
      %1558 = vmatpush1.msra.mxu0 0.0
      %1559 = vmatprep.subr.mxu0 0.0
      %1560 = vmatpush1.msra.mxu0 0.0
      %1561 = vmatprep.subr.mxu0 0.0
      %1562 = vmatpush1.msra.mxu0 0.0
      %1563 = vmatprep.subr.mxu0 0.0
      %1564 = vmatpush1.msra.mxu0 0.0
      %1565 = vmatprep.subr.mxu0 0.0
      %1566 = vmatpush1.msra.mxu0 0.0
      %1567 = vmatprep.subr.mxu0 0.0
      %1568 = vmatpush1.msra.mxu0 0.0
      %1569 = vmatprep.subr.mxu0 0.0
      %1570 = vmatpush1.msra.mxu0 0.0
      %1571 = vmatprep.subr.mxu0 0.0
      %1572 = vmatpush1.msra.mxu0 0.0
      %1573 = vmatprep.subr.mxu0 0.0
      %1574 = vmatpush1.msra.mxu0 0.0
      %1575 = vmatprep.subr.mxu0 0.0
      %1576 = vmatpush1.msra.mxu0 0.0
      %1577 = vmatprep.subr.mxu0 0.0
      %1578 = vmatpush1.msra.mxu0 0.0
      %1579 = vmatprep.subr.mxu0 0.0
      %1580 = vmatpush1.msra.mxu0 0.0
      %1581 = vmatprep.subr.mxu0 0.0
      %1582 = vmatpush1.msra.mxu0 0.0
      %1583 = vmatprep.subr.mxu0 0.0
      %1584 = vmatpush1.msra.mxu0 0.0
      %1585 = vmatprep.subr.mxu0 0.0
      %1586 = vmatpush1.msra.mxu0 0.0
      %1587 = vmatprep.subr.mxu0 0.0
      %1588 = vmatpush1.msra.mxu0 0.0
      %1589 = vmatprep.subr.mxu0 0.0
      %1590 = vmatpush1.msra.mxu0 0.0
      %1591 = vmatprep.subr.mxu0 0.0
      %1592 = vmatpush1.msra.mxu0 0.0
      %1593 = vmatprep.subr.mxu0 0.0
      %1594 = vmatpush1.msra.mxu0 0.0
      %1595 = vmatprep.subr.mxu0 0.0
      %1596 = vmatpush1.msra.mxu0 0.0
      %1597 = vmatprep.subr.mxu0 0.0
      %1598 = vmatpush1.msra.mxu0 0.0
      %1599 = vmatprep.subr.mxu0 0.0
      %1600 = vmatpush1.msra.mxu0 0.0
      %1601 = vmatprep.mubr.f32.mxu0 0.0
      %1602 = vmatmul.mubr.f32.gmra.mrb[0].mxu0 %v1518
      %v1603 = vpop.f32.mrb[0].mxu0
      %v1604 = vadd.f32 0.0, %v1603
      %v1605 = vpop.f32.mrb[0].mxu0
      %1606 = vmatprep.mubr.f32.mxu0 0.0
      %1607 = vmatmul.mubr.f32.gmra.mrb[0].mxu0 %v1520
      %v1608 = vpop.f32.mrb[0].mxu0
      %v1609 = vadd.f32 0.0, %v1608
      %v1610 = vpop.f32.mrb[0].mxu0
      %1611 = vmatprep.mubr.f32.mxu0 0.0
      %1612 = vmatmul.mubr.f32.gmra.mrb[0].mxu0 %v1522
      %v1613 = vpop.f32.mrb[0].mxu0
      %v1614 = vadd.f32 0.0, %v1613
      %v1615 = vpop.f32.mrb[0].mxu0
      %1616 = vmatprep.mubr.f32.mxu0 0.0
      %1617 = vmatmul.mubr.f32.gmra.mrb[0].mxu0 %v1524
      %v1618 = vpop.f32.mrb[0].mxu0
      %v1619 = vadd.f32 0.0, %v1618
      %v1620 = vpop.f32.mrb[0].mxu0
      %1621 = vmatprep.mubr.f32.mxu0 0.0
      %1622 = vmatmul.mubr.f32.gmra.mrb[0].mxu0 %v1526
      %v1623 = vpop.f32.mrb[0].mxu0
      %v1624 = vadd.f32 0.0, %v1623
      %v1625 = vpop.f32.mrb[0].mxu0
      %1626 = vmatprep.mubr.f32.mxu0 0.0
      %1627 = vmatmul.mubr.f32.gmra.mrb[0].mxu0 %v1528
      %v1628 = vpop.f32.mrb[0].mxu0
      %v1629 = vadd.f32 0.0, %v1628
      %v1630 = vpop.f32.mrb[0].mxu0
      %1631 = vmatprep.mubr.f32.mxu0 0.0
      %1632 = vmatmul.mubr.f32.gmra.mrb[0].mxu0 %v1530
      %v1633 = vpop.f32.mrb[0].mxu0
      %v1634 = vadd.f32 0.0, %v1633
      %v1635 = vpop.f32.mrb[0].mxu0
      %1636 = vmatprep.mubr.f32.mxu0 0.0
      %1637 = vmatmul.mubr.f32.gmra.mrb[0].mxu0 %v1532
      %v1638 = vpop.f32.mrb[0].mxu0
      %v1639 = vadd.f32 0.0, %v1638
      %v1640 = vpop.f32.mrb[0].mxu0
      %1641 = vdwg.mxu0
      %v1642 = vld [vmem:[%s8] sm:$0x1]
      %v1644 = vlaneseq
      %v1645 = vshrl.u32 %v1644, 7
      %v1646 = vsub.s32 0, %v1645
      %v1647 = vrot.slane %v1642, %v1646
      %v1649 = vmul.f32 %v1604, %v1647
      %v1650 = vmul.f32 %v1609, %v1647
      %v1651 = vmul.f32 %v1614, %v1647
      %v1652 = vmul.f32 %v1619, %v1647
      %v1653 = vmul.f32 %v1624, %v1647
      %v1654 = vmul.f32 %v1629, %v1647
      %v1655 = vmul.f32 %v1634, %v1647
      %v1656 = vmul.f32 %v1639, %v1647
      %v1657 = vld [vmem:[%s9] sm:$0x1]
      %v1659 = vlaneseq
      %v1660 = vshrl.u32 %v1659, 7
      %v1661 = vsub.s32 0, %v1660
      %v1662 = vrot.slane %v1657, %v1661
      %v1664 = vadd.f32 %v1649, %v1662
      %v1665 = vadd.f32 %v1650, %v1662
      %v1666 = vadd.f32 %v1651, %v1662
      %v1667 = vadd.f32 %v1652, %v1662
      %v1668 = vadd.f32 %v1653, %v1662
      %v1669 = vadd.f32 %v1654, %v1662
      %v1670 = vadd.f32 %v1655, %v1662
      %v1671 = vadd.f32 %v1656, %v1662
      %v1672 = vadd.f32 %v1509, %v1664
      %v1673 = vadd.f32 %v1510, %v1665
      %v1674 = vadd.f32 %v1511, %v1666
      %v1675 = vadd.f32 %v1512, %v1667
      %v1676 = vadd.f32 %v1513, %v1668
      %v1677 = vadd.f32 %v1514, %v1669
      %v1678 = vadd.f32 %v1515, %v1670
      %v1679 = vadd.f32 %v1516, %v1671
      %v1680 = vmax.f32 %v1672, 0.0
      %v1681 = vmax.f32 %v1673, 0.0
      %v1682 = vmax.f32 %v1674, 0.0
      %v1683 = vmax.f32 %v1675, 0.0
      %v1684 = vmax.f32 %v1676, 0.0
      %v1685 = vmax.f32 %v1677, 0.0
      %v1686 = vmax.f32 %v1678, 0.0
      %v1687 = vmax.f32 %v1679, 0.0
      %1688 = vst.msk [vmem:[%s359] sm:$0xff] %vm1014, %v1680
      %1689 = vst.msk [vmem:[%s359 + $0x8] sm:$0xff] %vm1014, %v1681
      %1690 = vst.msk [vmem:[%s359 + $0x10] sm:$0xff] %vm1014, %v1682
      %1691 = vst.msk [vmem:[%s359 + $0x18] sm:$0xff] %vm1014, %v1683
      %1692 = vst.msk [vmem:[%s359 + $0x20] sm:$0xff] %vm1014, %v1684
      %1693 = vst.msk [vmem:[%s359 + $0x28] sm:$0xff] %vm1014, %v1685
      %1694 = vst.msk [vmem:[%s359 + $0x30] sm:$0xff] %vm1014, %v1686
      %1695 = vst.msk [vmem:[%s359 + $0x38] sm:$0xff] %vm1014, %v1687
      %p1696 = scmp.lt.s32.totalorder %s21, 1
      %s1697 = scalar_select %p1696, %s21, 1
      %s1698 = smul.addr %s1697, 8
      %s1699 = smul.addr %s1698, 8
      %s1700 = scalar_lea.vmem %s10, %s1699
      // Predicated region
      $region61: #{tpu_custom_call.1} parent=59 // pred_check
        %p1701 = pneg %p254
      $region62: #{tpu_custom_call.1} parent=59 // pred_check_branch
        %1703 = sbr.rel (%p1701) target = $region64
      $region63: #{tpu_custom_call.1} parent=59 // pred_region
        _
      $region64: #{tpu_custom_call.1} parent=59 // pred_fallthru
        _
    $region60: #{tpu_custom_call.1} parent=5 // pred_fallthru
      _
    %p1704 = scmp.le.s32.totalorder 2, %s16
    // Predicated region
    $region65: #{tpu_custom_call.1} parent=5 // pred_check
      %p1705 = pneg %p1704
    $region66: #{tpu_custom_call.1} parent=5 // pred_check_branch
      %1707 = sbr.rel (%p1705) target = $region68
    $region67: #{tpu_custom_call.1} parent=5 // pred_region
      %s1708 = ssub.s32 %s16, 2
      // Predicated region
      $region69: #{tpu_custom_call.1} parent=67 // pred_check
        %p1709 = pneg %p260
      $region70: #{tpu_custom_call.1} parent=67 // pred_check_branch
        %1711 = sbr.rel (%p1709) target = $region72
      $region71: #{tpu_custom_call.1} parent=67 // pred_region
        %p1712 = scmp.lt.s32.totalorder %s22, 1
        %s1713 = scalar_select %p1712, %s22, 1
        %s1714 = smul.addr %s1713, 8
        %s1715 = smul.addr %s1714, 8
        %s1716 = scalar_lea.vmem %s10, %s1715
      $region72: #{tpu_custom_call.1} parent=67 // pred_fallthru
        _
    $region68: #{tpu_custom_call.1} parent=5 // pred_fallthru
      _
  $region6: #{tpu_custom_call.1} parent=0 // loop_footer
    %s20 = sadd.s32 1, %s16
  $region7: #{tpu_custom_call.1} parent=0 // loop_footer_branch
    %15 = sbr.rel target = $region3
  $region8: #{tpu_custom_call.1} parent=0 // loop_exit
    _

</llo_original>
